<compile_context>
chip_gen: v5e
topology: v5e:2x2
jax: 0.10.0
libtpu: 0.0.40
codegen_flags: <defaults>
</compile_context>

<pallas_src>
import jax
import jax.numpy as jnp
from jax.experimental import pallas as pl
from jax.experimental.pallas import tpu as pltpu

# ----------------------- model dims (small, consistent with the module) ------
OUTPUT_DIM = 256   # vocab size (len(headline_vocab)) -- synthetic small vocab
EMB_DIM    = 128   # emb_dim
HIDDEN_DIM = 128   # hidden_dim (shrunk from 256 to keep the example small)
N_LAYERS   = 2     # n_layers
BATCH      = 8


# ----------------------------- Pallas kernel ---------------------------------
def _decoder_kernel(idx_ref,                      # SMEM (B,) int32 token ids
                    h_ref, c_ref,                 # VMEM (L, B, H) f32 states
                    w0_ref, b0_ref,               # (E+H, 4H) bf16, (B, 4H) f32
                    w1_ref, b1_ref,               # (2H,  4H) bf16, (B, 4H) f32
                    wfc_ref, bfc_ref,             # (H, V)   bf16, (B, V)  f32
                    emb_hbm,                      # ANY/HBM (V, E) f32 table
                    preds_ref, hout_ref, cout_ref,   # outputs
                    emb_buf, sem):                # scratch: VMEM (B, E) f32, DMA sems (B,)
    B, E = emb_buf.shape
    H = h_ref.shape[-1]

    # --- in-kernel embedding gather: B row DMAs HBM -> VMEM scratch -----------
    for b in range(B):
        pltpu.make_async_copy(emb_hbm.at[pl.ds(idx_ref[b], 1)],
                              emb_buf.at[pl.ds(b, 1)],
                              sem.at[b]).start()
    for b in range(B):
        pltpu.make_async_copy(emb_hbm.at[pl.ds(idx_ref[b], 1)],
                              emb_buf.at[pl.ds(b, 1)],
                              sem.at[b]).wait()

    def lstm_cell(x, h, c, w_ref, b_ref):
        # single fused matmul: [x | h] @ [W_ih^T ; W_hh^T]  (PyTorch gate order i,f,g,o)
        xh = jnp.concatenate([x, h], axis=-1).astype(jnp.bfloat16)
        gates = jnp.dot(xh, w_ref[...],
                        preferred_element_type=jnp.float32) + b_ref[...]
        i = jax.nn.sigmoid(gates[:, 0:H])
        f = jax.nn.sigmoid(gates[:, H:2 * H])
        g = jnp.tanh(gates[:, 2 * H:3 * H])
        o = jax.nn.sigmoid(gates[:, 3 * H:4 * H])
        c_new = f * c + i * g
        h_new = o * jnp.tanh(c_new)
        return h_new, c_new

    x = emb_buf[...]                          # (B, E) embedded tokens (seq len 1)

    # layer 0
    h0_new, c0_new = lstm_cell(x, h_ref[0], c_ref[0], w0_ref, b0_ref)
    # inter-layer dropout is identity at inference
    # layer 1
    h1_new, c1_new = lstm_cell(h0_new, h_ref[1], c_ref[1], w1_ref, b1_ref)

    # final projection: preds = h1_new @ W_fc^T + b_fc
    preds_ref[...] = (jnp.dot(h1_new.astype(jnp.bfloat16), wfc_ref[...],
                              preferred_element_type=jnp.float32)
                      + bfc_ref[...])

    hout_ref[0] = h0_new
    hout_ref[1] = h1_new
    cout_ref[0] = c0_new
    cout_ref[1] = c1_new


def decoder_forward(params, x_idx, hidden_state, cell_state):
    """One decoder step.

    x_idx:        (B,)   int32 token ids
    hidden_state: (n_layers, B, H) f32
    cell_state:   (n_layers, B, H) f32
    returns (preds (B, V), hidden_state, cell_state)
    """
    B = x_idx.shape[0]

    smem = pl.BlockSpec(memory_space=pltpu.MemorySpace.SMEM)
    vmem = pl.BlockSpec(memory_space=pltpu.MemorySpace.VMEM)
    anyms = pl.BlockSpec(memory_space=pl.ANY)

    preds, h_new, c_new = pl.pallas_call(
        _decoder_kernel,
        out_shape=(
            jax.ShapeDtypeStruct((B, OUTPUT_DIM), jnp.float32),
            jax.ShapeDtypeStruct((N_LAYERS, B, HIDDEN_DIM), jnp.float32),
            jax.ShapeDtypeStruct((N_LAYERS, B, HIDDEN_DIM), jnp.float32),
        ),
        in_specs=[smem,                      # x_idx
                  vmem, vmem,                # hidden, cell
                  vmem, vmem, vmem, vmem,    # w0, b0, w1, b1
                  vmem, vmem,                # wfc, bfc
                  anyms],                    # embedding table stays in HBM
        out_specs=(vmem, vmem, vmem),
        scratch_shapes=[pltpu.VMEM((B, EMB_DIM), jnp.float32),
                        pltpu.SemaphoreType.DMA((B,))],
        # state carry is in-place (when the caller donates the buffers)
        input_output_aliases={1: 1, 2: 2},
    )(x_idx, hidden_state, cell_state,
      params["w0"], params["b0"], params["w1"], params["b1"],
      params["wfc"], params["bfc"], params["embedding"])

    return preds, h_new, c_new


# ------------------------- deterministic parameter init ----------------------
def init_params(key):
    ks = jax.random.split(key, 12)
    H, E, V = HIDDEN_DIM, EMB_DIM, OUTPUT_DIM
    s = 1.0 / jnp.sqrt(H)

    def u(k, shape):
        return jax.random.uniform(k, shape, jnp.float32, -s, s)

    wih0 = u(ks[1], (E, 4 * H))              # W_ih^T (layer 0, input size E)
    whh0 = u(ks[2], (H, 4 * H))              # W_hh^T
    b0 = u(ks[3], (1, 4 * H)) + u(ks[4], (1, 4 * H))      # b_ih + b_hh
    wih1 = u(ks[5], (H, 4 * H))              # W_ih^T (layer 1, input size H)
    whh1 = u(ks[6], (H, 4 * H))
    b1 = u(ks[7], (1, 4 * H)) + u(ks[8], (1, 4 * H))
    wfc = u(ks[9], (H, V))                   # W_fc^T
    bfc = u(ks[10], (1, V))

    return {
        "embedding": jax.random.normal(ks[0], (V, E), jnp.float32),
        # fused LSTM weights: [W_ih^T ; W_hh^T], stored bf16
        "w0": jnp.concatenate([wih0, whh0], axis=0).astype(jnp.bfloat16),  # (E+H, 4H)
        "w1": jnp.concatenate([wih1, whh1], axis=0).astype(jnp.bfloat16),  # (2H, 4H)
        # biases pre-added and pre-broadcast to (B, ...)
        "b0": jnp.broadcast_to(b0, (BATCH, 4 * H)),
        "b1": jnp.broadcast_to(b1, (BATCH, 4 * H)),
        "wfc": wfc.astype(jnp.bfloat16),
        "bfc": jnp.broadcast_to(bfc, (BATCH, V)),
    }


# ------------------------------ pure-JAX reference ----------------------------
def decoder_ref(params, x_idx, h, c):
    H = HIDDEN_DIM
    x = params["embedding"][x_idx]                         # (B, E) f32

    def cell(x, h, c, w, b):
        xh = jnp.concatenate([x, h], axis=-1).astype(jnp.bfloat16)
        g = jnp.dot(xh, w, preferred_element_type=jnp.float32) + b
        i = jax.nn.sigmoid(g[:, :H]); f = jax.nn.sigmoid(g[:, H:2 * H])
        gg = jnp.tanh(g[:, 2 * H:3 * H]); o = jax.nn.sigmoid(g[:, 3 * H:])
        cn = f * c + i * gg
        return o * jnp.tanh(cn), cn

    h0, c0 = cell(x, h[0], c[0], params["w0"], params["b0"])
    h1, c1 = cell(h0, h[1], c[1], params["w1"], params["b1"])
    preds = jnp.dot(h1.astype(jnp.bfloat16), params["wfc"],
                    preferred_element_type=jnp.float32) + params["bfc"]
    return preds, jnp.stack([h0, h1]), jnp.stack([c0, c1])


# ----------------------------------- main -------------------------------------
if __name__ == "__main__":
    key = jax.random.PRNGKey(0)
    kp, kx, kh, kc = jax.random.split(key, 4)

    params = init_params(kp)
    x_idx = jax.random.randint(kx, (BATCH,), 0, OUTPUT_DIM, dtype=jnp.int32)
    hidden_state = jax.random.normal(kh, (N_LAYERS, BATCH, HIDDEN_DIM), jnp.float32)
    cell_state = jax.random.normal(kc, (N_LAYERS, BATCH, HIDDEN_DIM), jnp.float32)

    # pure-JAX reference (computed first, before the aliased kernel call)
    preds_r, h_r, c_r = jax.block_until_ready(
        decoder_ref(params, x_idx, hidden_state, cell_state))

    preds, h_new, c_new = jax.block_until_ready(
        decoder_forward(params, x_idx, hidden_state, cell_state))

    assert jnp.allclose(preds, preds_r, atol=1e-2), "preds mismatch"
    assert jnp.allclose(h_new, h_r, atol=1e-2), "hidden mismatch"
    assert jnp.allclose(c_new, c_r, atol=1e-2), "cell mismatch"

    print("KERNEL_OK")
</pallas_src>

<mosaic_0001>
module attributes {stable_mosaic.version = 11 : i64} {
  func.func @_decoder_kernel(%arg0: memref<8xi32, #tpu.memory_space<smem>>, %arg1: memref<2x8x128xf32, #tpu.memory_space<vmem>>, %arg2: memref<2x8x128xf32, #tpu.memory_space<vmem>>, %arg3: memref<256x512xbf16, #tpu.memory_space<vmem>>, %arg4: memref<8x512xf32, #tpu.memory_space<vmem>>, %arg5: memref<256x512xbf16, #tpu.memory_space<vmem>>, %arg6: memref<8x512xf32, #tpu.memory_space<vmem>>, %arg7: memref<128x256xbf16, #tpu.memory_space<vmem>>, %arg8: memref<8x256xf32, #tpu.memory_space<vmem>>, %arg9: memref<256x128xf32, #tpu.memory_space<any>>, %arg10: memref<8x256xf32, #tpu.memory_space<vmem>>, %arg11: memref<2x8x128xf32, #tpu.memory_space<vmem>>, %arg12: memref<2x8x128xf32, #tpu.memory_space<vmem>>, %arg13: memref<8x128xf32, #tpu.memory_space<vmem>>, %arg14: memref<8x!tpu.dma_semaphore, #tpu.memory_space<semaphore_mem>>) attributes {dimension_semantics = [], scalar_prefetch = 0 : i64, scratch_operands = 2 : i64, tpu.core_type = #tpu.core_type<tc>} {
    %c0 = arith.constant 0 : index
    %0 = memref.load %arg0[%c0] : memref<8xi32, #tpu.memory_space<smem>>
    %c0_i32 = arith.constant 0 : i32
    %c0_i32_0 = arith.constant 0 : i32
    %1 = tpu.memref_slice %arg9[%0, %c0_i32_0] : memref<256x128xf32, #tpu.memory_space<any>> -> memref<1x128xf32, #tpu.memory_space<any>>
    %c0_i32_1 = arith.constant 0 : i32
    %c0_i32_2 = arith.constant 0 : i32
    %2 = tpu.memref_slice %arg13[%c0_i32_1, %c0_i32_2] : memref<8x128xf32, #tpu.memory_space<vmem>> -> memref<1x128xf32, #tpu.memory_space<vmem>>
    %3 = tpu.memref_slice %arg14[%c0_i32] : memref<8x!tpu.dma_semaphore, #tpu.memory_space<semaphore_mem>> -> memref<1x!tpu.dma_semaphore, #tpu.memory_space<semaphore_mem>>
    %4 = tpu.memref_squeeze %3 : memref<1x!tpu.dma_semaphore, #tpu.memory_space<semaphore_mem>> -> memref<!tpu.dma_semaphore, #tpu.memory_space<semaphore_mem>>
    tpu.enqueue_dma source(%1 : memref<1x128xf32, #tpu.memory_space<any>>) target(%2 : memref<1x128xf32, #tpu.memory_space<vmem>>) target_semaphore(%4 : memref<!tpu.dma_semaphore, #tpu.memory_space<semaphore_mem>>)
    %c1 = arith.constant 1 : index
    %5 = memref.load %arg0[%c1] : memref<8xi32, #tpu.memory_space<smem>>
    %c1_i32 = arith.constant 1 : i32
    %c0_i32_3 = arith.constant 0 : i32
    %6 = tpu.memref_slice %arg9[%5, %c0_i32_3] : memref<256x128xf32, #tpu.memory_space<any>> -> memref<1x128xf32, #tpu.memory_space<any>>
    %c1_i32_4 = arith.constant 1 : i32
    %c0_i32_5 = arith.constant 0 : i32
    %7 = tpu.memref_slice %arg13[%c1_i32_4, %c0_i32_5] : memref<8x128xf32, #tpu.memory_space<vmem>> -> memref<1x128xf32, #tpu.memory_space<vmem>>
    %8 = tpu.memref_slice %arg14[%c1_i32] : memref<8x!tpu.dma_semaphore, #tpu.memory_space<semaphore_mem>> -> memref<1x!tpu.dma_semaphore, #tpu.memory_space<semaphore_mem>>
    %9 = tpu.memref_squeeze %8 : memref<1x!tpu.dma_semaphore, #tpu.memory_space<semaphore_mem>> -> memref<!tpu.dma_semaphore, #tpu.memory_space<semaphore_mem>>
    tpu.enqueue_dma source(%6 : memref<1x128xf32, #tpu.memory_space<any>>) target(%7 : memref<1x128xf32, #tpu.memory_space<vmem>>) target_semaphore(%9 : memref<!tpu.dma_semaphore, #tpu.memory_space<semaphore_mem>>)
    %c2 = arith.constant 2 : index
    %10 = memref.load %arg0[%c2] : memref<8xi32, #tpu.memory_space<smem>>
    %c2_i32 = arith.constant 2 : i32
    %c0_i32_6 = arith.constant 0 : i32
    %11 = tpu.memref_slice %arg9[%10, %c0_i32_6] : memref<256x128xf32, #tpu.memory_space<any>> -> memref<1x128xf32, #tpu.memory_space<any>>
    %c2_i32_7 = arith.constant 2 : i32
    %c0_i32_8 = arith.constant 0 : i32
    %12 = tpu.memref_slice %arg13[%c2_i32_7, %c0_i32_8] : memref<8x128xf32, #tpu.memory_space<vmem>> -> memref<1x128xf32, #tpu.memory_space<vmem>>
    %13 = tpu.memref_slice %arg14[%c2_i32] : memref<8x!tpu.dma_semaphore, #tpu.memory_space<semaphore_mem>> -> memref<1x!tpu.dma_semaphore, #tpu.memory_space<semaphore_mem>>
    %14 = tpu.memref_squeeze %13 : memref<1x!tpu.dma_semaphore, #tpu.memory_space<semaphore_mem>> -> memref<!tpu.dma_semaphore, #tpu.memory_space<semaphore_mem>>
    tpu.enqueue_dma source(%11 : memref<1x128xf32, #tpu.memory_space<any>>) target(%12 : memref<1x128xf32, #tpu.memory_space<vmem>>) target_semaphore(%14 : memref<!tpu.dma_semaphore, #tpu.memory_space<semaphore_mem>>)
    %c3 = arith.constant 3 : index
    %15 = memref.load %arg0[%c3] : memref<8xi32, #tpu.memory_space<smem>>
    %c3_i32 = arith.constant 3 : i32
    %c0_i32_9 = arith.constant 0 : i32
    %16 = tpu.memref_slice %arg9[%15, %c0_i32_9] : memref<256x128xf32, #tpu.memory_space<any>> -> memref<1x128xf32, #tpu.memory_space<any>>
    %c3_i32_10 = arith.constant 3 : i32
    %c0_i32_11 = arith.constant 0 : i32
    %17 = tpu.memref_slice %arg13[%c3_i32_10, %c0_i32_11] : memref<8x128xf32, #tpu.memory_space<vmem>> -> memref<1x128xf32, #tpu.memory_space<vmem>>
    %18 = tpu.memref_slice %arg14[%c3_i32] : memref<8x!tpu.dma_semaphore, #tpu.memory_space<semaphore_mem>> -> memref<1x!tpu.dma_semaphore, #tpu.memory_space<semaphore_mem>>
    %19 = tpu.memref_squeeze %18 : memref<1x!tpu.dma_semaphore, #tpu.memory_space<semaphore_mem>> -> memref<!tpu.dma_semaphore, #tpu.memory_space<semaphore_mem>>
    tpu.enqueue_dma source(%16 : memref<1x128xf32, #tpu.memory_space<any>>) target(%17 : memref<1x128xf32, #tpu.memory_space<vmem>>) target_semaphore(%19 : memref<!tpu.dma_semaphore, #tpu.memory_space<semaphore_mem>>)
    %c4 = arith.constant 4 : index
    %20 = memref.load %arg0[%c4] : memref<8xi32, #tpu.memory_space<smem>>
    %c4_i32 = arith.constant 4 : i32
    %c0_i32_12 = arith.constant 0 : i32
    %21 = tpu.memref_slice %arg9[%20, %c0_i32_12] : memref<256x128xf32, #tpu.memory_space<any>> -> memref<1x128xf32, #tpu.memory_space<any>>
    %c4_i32_13 = arith.constant 4 : i32
    %c0_i32_14 = arith.constant 0 : i32
    %22 = tpu.memref_slice %arg13[%c4_i32_13, %c0_i32_14] : memref<8x128xf32, #tpu.memory_space<vmem>> -> memref<1x128xf32, #tpu.memory_space<vmem>>
    %23 = tpu.memref_slice %arg14[%c4_i32] : memref<8x!tpu.dma_semaphore, #tpu.memory_space<semaphore_mem>> -> memref<1x!tpu.dma_semaphore, #tpu.memory_space<semaphore_mem>>
    %24 = tpu.memref_squeeze %23 : memref<1x!tpu.dma_semaphore, #tpu.memory_space<semaphore_mem>> -> memref<!tpu.dma_semaphore, #tpu.memory_space<semaphore_mem>>
    tpu.enqueue_dma source(%21 : memref<1x128xf32, #tpu.memory_space<any>>) target(%22 : memref<1x128xf32, #tpu.memory_space<vmem>>) target_semaphore(%24 : memref<!tpu.dma_semaphore, #tpu.memory_space<semaphore_mem>>)
    %c5 = arith.constant 5 : index
    %25 = memref.load %arg0[%c5] : memref<8xi32, #tpu.memory_space<smem>>
    %c5_i32 = arith.constant 5 : i32
    %c0_i32_15 = arith.constant 0 : i32
    %26 = tpu.memref_slice %arg9[%25, %c0_i32_15] : memref<256x128xf32, #tpu.memory_space<any>> -> memref<1x128xf32, #tpu.memory_space<any>>
    %c5_i32_16 = arith.constant 5 : i32
    %c0_i32_17 = arith.constant 0 : i32
    %27 = tpu.memref_slice %arg13[%c5_i32_16, %c0_i32_17] : memref<8x128xf32, #tpu.memory_space<vmem>> -> memref<1x128xf32, #tpu.memory_space<vmem>>
    %28 = tpu.memref_slice %arg14[%c5_i32] : memref<8x!tpu.dma_semaphore, #tpu.memory_space<semaphore_mem>> -> memref<1x!tpu.dma_semaphore, #tpu.memory_space<semaphore_mem>>
    %29 = tpu.memref_squeeze %28 : memref<1x!tpu.dma_semaphore, #tpu.memory_space<semaphore_mem>> -> memref<!tpu.dma_semaphore, #tpu.memory_space<semaphore_mem>>
    tpu.enqueue_dma source(%26 : memref<1x128xf32, #tpu.memory_space<any>>) target(%27 : memref<1x128xf32, #tpu.memory_space<vmem>>) target_semaphore(%29 : memref<!tpu.dma_semaphore, #tpu.memory_space<semaphore_mem>>)
    %c6 = arith.constant 6 : index
    %30 = memref.load %arg0[%c6] : memref<8xi32, #tpu.memory_space<smem>>
    %c6_i32 = arith.constant 6 : i32
    %c0_i32_18 = arith.constant 0 : i32
    %31 = tpu.memref_slice %arg9[%30, %c0_i32_18] : memref<256x128xf32, #tpu.memory_space<any>> -> memref<1x128xf32, #tpu.memory_space<any>>
    %c6_i32_19 = arith.constant 6 : i32
    %c0_i32_20 = arith.constant 0 : i32
    %32 = tpu.memref_slice %arg13[%c6_i32_19, %c0_i32_20] : memref<8x128xf32, #tpu.memory_space<vmem>> -> memref<1x128xf32, #tpu.memory_space<vmem>>
    %33 = tpu.memref_slice %arg14[%c6_i32] : memref<8x!tpu.dma_semaphore, #tpu.memory_space<semaphore_mem>> -> memref<1x!tpu.dma_semaphore, #tpu.memory_space<semaphore_mem>>
    %34 = tpu.memref_squeeze %33 : memref<1x!tpu.dma_semaphore, #tpu.memory_space<semaphore_mem>> -> memref<!tpu.dma_semaphore, #tpu.memory_space<semaphore_mem>>
    tpu.enqueue_dma source(%31 : memref<1x128xf32, #tpu.memory_space<any>>) target(%32 : memref<1x128xf32, #tpu.memory_space<vmem>>) target_semaphore(%34 : memref<!tpu.dma_semaphore, #tpu.memory_space<semaphore_mem>>)
    %c7 = arith.constant 7 : index
    %35 = memref.load %arg0[%c7] : memref<8xi32, #tpu.memory_space<smem>>
    %c7_i32 = arith.constant 7 : i32
    %c0_i32_21 = arith.constant 0 : i32
    %36 = tpu.memref_slice %arg9[%35, %c0_i32_21] : memref<256x128xf32, #tpu.memory_space<any>> -> memref<1x128xf32, #tpu.memory_space<any>>
    %c7_i32_22 = arith.constant 7 : i32
    %c0_i32_23 = arith.constant 0 : i32
    %37 = tpu.memref_slice %arg13[%c7_i32_22, %c0_i32_23] : memref<8x128xf32, #tpu.memory_space<vmem>> -> memref<1x128xf32, #tpu.memory_space<vmem>>
    %38 = tpu.memref_slice %arg14[%c7_i32] : memref<8x!tpu.dma_semaphore, #tpu.memory_space<semaphore_mem>> -> memref<1x!tpu.dma_semaphore, #tpu.memory_space<semaphore_mem>>
    %39 = tpu.memref_squeeze %38 : memref<1x!tpu.dma_semaphore, #tpu.memory_space<semaphore_mem>> -> memref<!tpu.dma_semaphore, #tpu.memory_space<semaphore_mem>>
    tpu.enqueue_dma source(%36 : memref<1x128xf32, #tpu.memory_space<any>>) target(%37 : memref<1x128xf32, #tpu.memory_space<vmem>>) target_semaphore(%39 : memref<!tpu.dma_semaphore, #tpu.memory_space<semaphore_mem>>)
    %c0_24 = arith.constant 0 : index
    %40 = memref.load %arg0[%c0_24] : memref<8xi32, #tpu.memory_space<smem>>
    %c0_i32_25 = arith.constant 0 : i32
    %c0_i32_26 = arith.constant 0 : i32
    %41 = tpu.memref_slice %arg9[%40, %c0_i32_26] : memref<256x128xf32, #tpu.memory_space<any>> -> memref<1x128xf32, #tpu.memory_space<any>>
    %c0_i32_27 = arith.constant 0 : i32
    %c0_i32_28 = arith.constant 0 : i32
    %42 = tpu.memref_slice %arg13[%c0_i32_27, %c0_i32_28] : memref<8x128xf32, #tpu.memory_space<vmem>> -> memref<1x128xf32, #tpu.memory_space<vmem>>
    %43 = tpu.memref_slice %arg14[%c0_i32_25] : memref<8x!tpu.dma_semaphore, #tpu.memory_space<semaphore_mem>> -> memref<1x!tpu.dma_semaphore, #tpu.memory_space<semaphore_mem>>
    %44 = tpu.memref_squeeze %43 : memref<1x!tpu.dma_semaphore, #tpu.memory_space<semaphore_mem>> -> memref<!tpu.dma_semaphore, #tpu.memory_space<semaphore_mem>>
    tpu.wait_dma2 semaphore(%44 : memref<!tpu.dma_semaphore, #tpu.memory_space<semaphore_mem>>) src(%41 : memref<1x128xf32, #tpu.memory_space<any>>) dst(%42 : memref<1x128xf32, #tpu.memory_space<vmem>>)
    %c1_29 = arith.constant 1 : index
    %45 = memref.load %arg0[%c1_29] : memref<8xi32, #tpu.memory_space<smem>>
    %c1_i32_30 = arith.constant 1 : i32
    %c0_i32_31 = arith.constant 0 : i32
    %46 = tpu.memref_slice %arg9[%45, %c0_i32_31] : memref<256x128xf32, #tpu.memory_space<any>> -> memref<1x128xf32, #tpu.memory_space<any>>
    %c1_i32_32 = arith.constant 1 : i32
    %c0_i32_33 = arith.constant 0 : i32
    %47 = tpu.memref_slice %arg13[%c1_i32_32, %c0_i32_33] : memref<8x128xf32, #tpu.memory_space<vmem>> -> memref<1x128xf32, #tpu.memory_space<vmem>>
    %48 = tpu.memref_slice %arg14[%c1_i32_30] : memref<8x!tpu.dma_semaphore, #tpu.memory_space<semaphore_mem>> -> memref<1x!tpu.dma_semaphore, #tpu.memory_space<semaphore_mem>>
    %49 = tpu.memref_squeeze %48 : memref<1x!tpu.dma_semaphore, #tpu.memory_space<semaphore_mem>> -> memref<!tpu.dma_semaphore, #tpu.memory_space<semaphore_mem>>
    tpu.wait_dma2 semaphore(%49 : memref<!tpu.dma_semaphore, #tpu.memory_space<semaphore_mem>>) src(%46 : memref<1x128xf32, #tpu.memory_space<any>>) dst(%47 : memref<1x128xf32, #tpu.memory_space<vmem>>)
    %c2_34 = arith.constant 2 : index
    %50 = memref.load %arg0[%c2_34] : memref<8xi32, #tpu.memory_space<smem>>
    %c2_i32_35 = arith.constant 2 : i32
    %c0_i32_36 = arith.constant 0 : i32
    %51 = tpu.memref_slice %arg9[%50, %c0_i32_36] : memref<256x128xf32, #tpu.memory_space<any>> -> memref<1x128xf32, #tpu.memory_space<any>>
    %c2_i32_37 = arith.constant 2 : i32
    %c0_i32_38 = arith.constant 0 : i32
    %52 = tpu.memref_slice %arg13[%c2_i32_37, %c0_i32_38] : memref<8x128xf32, #tpu.memory_space<vmem>> -> memref<1x128xf32, #tpu.memory_space<vmem>>
    %53 = tpu.memref_slice %arg14[%c2_i32_35] : memref<8x!tpu.dma_semaphore, #tpu.memory_space<semaphore_mem>> -> memref<1x!tpu.dma_semaphore, #tpu.memory_space<semaphore_mem>>
    %54 = tpu.memref_squeeze %53 : memref<1x!tpu.dma_semaphore, #tpu.memory_space<semaphore_mem>> -> memref<!tpu.dma_semaphore, #tpu.memory_space<semaphore_mem>>
    tpu.wait_dma2 semaphore(%54 : memref<!tpu.dma_semaphore, #tpu.memory_space<semaphore_mem>>) src(%51 : memref<1x128xf32, #tpu.memory_space<any>>) dst(%52 : memref<1x128xf32, #tpu.memory_space<vmem>>)
    %c3_39 = arith.constant 3 : index
    %55 = memref.load %arg0[%c3_39] : memref<8xi32, #tpu.memory_space<smem>>
    %c3_i32_40 = arith.constant 3 : i32
    %c0_i32_41 = arith.constant 0 : i32
    %56 = tpu.memref_slice %arg9[%55, %c0_i32_41] : memref<256x128xf32, #tpu.memory_space<any>> -> memref<1x128xf32, #tpu.memory_space<any>>
    %c3_i32_42 = arith.constant 3 : i32
    %c0_i32_43 = arith.constant 0 : i32
    %57 = tpu.memref_slice %arg13[%c3_i32_42, %c0_i32_43] : memref<8x128xf32, #tpu.memory_space<vmem>> -> memref<1x128xf32, #tpu.memory_space<vmem>>
    %58 = tpu.memref_slice %arg14[%c3_i32_40] : memref<8x!tpu.dma_semaphore, #tpu.memory_space<semaphore_mem>> -> memref<1x!tpu.dma_semaphore, #tpu.memory_space<semaphore_mem>>
    %59 = tpu.memref_squeeze %58 : memref<1x!tpu.dma_semaphore, #tpu.memory_space<semaphore_mem>> -> memref<!tpu.dma_semaphore, #tpu.memory_space<semaphore_mem>>
    tpu.wait_dma2 semaphore(%59 : memref<!tpu.dma_semaphore, #tpu.memory_space<semaphore_mem>>) src(%56 : memref<1x128xf32, #tpu.memory_space<any>>) dst(%57 : memref<1x128xf32, #tpu.memory_space<vmem>>)
    %c4_44 = arith.constant 4 : index
    %60 = memref.load %arg0[%c4_44] : memref<8xi32, #tpu.memory_space<smem>>
    %c4_i32_45 = arith.constant 4 : i32
    %c0_i32_46 = arith.constant 0 : i32
    %61 = tpu.memref_slice %arg9[%60, %c0_i32_46] : memref<256x128xf32, #tpu.memory_space<any>> -> memref<1x128xf32, #tpu.memory_space<any>>
    %c4_i32_47 = arith.constant 4 : i32
    %c0_i32_48 = arith.constant 0 : i32
    %62 = tpu.memref_slice %arg13[%c4_i32_47, %c0_i32_48] : memref<8x128xf32, #tpu.memory_space<vmem>> -> memref<1x128xf32, #tpu.memory_space<vmem>>
    %63 = tpu.memref_slice %arg14[%c4_i32_45] : memref<8x!tpu.dma_semaphore, #tpu.memory_space<semaphore_mem>> -> memref<1x!tpu.dma_semaphore, #tpu.memory_space<semaphore_mem>>
    %64 = tpu.memref_squeeze %63 : memref<1x!tpu.dma_semaphore, #tpu.memory_space<semaphore_mem>> -> memref<!tpu.dma_semaphore, #tpu.memory_space<semaphore_mem>>
    tpu.wait_dma2 semaphore(%64 : memref<!tpu.dma_semaphore, #tpu.memory_space<semaphore_mem>>) src(%61 : memref<1x128xf32, #tpu.memory_space<any>>) dst(%62 : memref<1x128xf32, #tpu.memory_space<vmem>>)
    %c5_49 = arith.constant 5 : index
    %65 = memref.load %arg0[%c5_49] : memref<8xi32, #tpu.memory_space<smem>>
    %c5_i32_50 = arith.constant 5 : i32
    %c0_i32_51 = arith.constant 0 : i32
    %66 = tpu.memref_slice %arg9[%65, %c0_i32_51] : memref<256x128xf32, #tpu.memory_space<any>> -> memref<1x128xf32, #tpu.memory_space<any>>
    %c5_i32_52 = arith.constant 5 : i32
    %c0_i32_53 = arith.constant 0 : i32
    %67 = tpu.memref_slice %arg13[%c5_i32_52, %c0_i32_53] : memref<8x128xf32, #tpu.memory_space<vmem>> -> memref<1x128xf32, #tpu.memory_space<vmem>>
    %68 = tpu.memref_slice %arg14[%c5_i32_50] : memref<8x!tpu.dma_semaphore, #tpu.memory_space<semaphore_mem>> -> memref<1x!tpu.dma_semaphore, #tpu.memory_space<semaphore_mem>>
    %69 = tpu.memref_squeeze %68 : memref<1x!tpu.dma_semaphore, #tpu.memory_space<semaphore_mem>> -> memref<!tpu.dma_semaphore, #tpu.memory_space<semaphore_mem>>
    tpu.wait_dma2 semaphore(%69 : memref<!tpu.dma_semaphore, #tpu.memory_space<semaphore_mem>>) src(%66 : memref<1x128xf32, #tpu.memory_space<any>>) dst(%67 : memref<1x128xf32, #tpu.memory_space<vmem>>)
    %c6_54 = arith.constant 6 : index
    %70 = memref.load %arg0[%c6_54] : memref<8xi32, #tpu.memory_space<smem>>
    %c6_i32_55 = arith.constant 6 : i32
    %c0_i32_56 = arith.constant 0 : i32
    %71 = tpu.memref_slice %arg9[%70, %c0_i32_56] : memref<256x128xf32, #tpu.memory_space<any>> -> memref<1x128xf32, #tpu.memory_space<any>>
    %c6_i32_57 = arith.constant 6 : i32
    %c0_i32_58 = arith.constant 0 : i32
    %72 = tpu.memref_slice %arg13[%c6_i32_57, %c0_i32_58] : memref<8x128xf32, #tpu.memory_space<vmem>> -> memref<1x128xf32, #tpu.memory_space<vmem>>
    %73 = tpu.memref_slice %arg14[%c6_i32_55] : memref<8x!tpu.dma_semaphore, #tpu.memory_space<semaphore_mem>> -> memref<1x!tpu.dma_semaphore, #tpu.memory_space<semaphore_mem>>
    %74 = tpu.memref_squeeze %73 : memref<1x!tpu.dma_semaphore, #tpu.memory_space<semaphore_mem>> -> memref<!tpu.dma_semaphore, #tpu.memory_space<semaphore_mem>>
    tpu.wait_dma2 semaphore(%74 : memref<!tpu.dma_semaphore, #tpu.memory_space<semaphore_mem>>) src(%71 : memref<1x128xf32, #tpu.memory_space<any>>) dst(%72 : memref<1x128xf32, #tpu.memory_space<vmem>>)
    %c7_59 = arith.constant 7 : index
    %75 = memref.load %arg0[%c7_59] : memref<8xi32, #tpu.memory_space<smem>>
    %c7_i32_60 = arith.constant 7 : i32
    %c0_i32_61 = arith.constant 0 : i32
    %76 = tpu.memref_slice %arg9[%75, %c0_i32_61] : memref<256x128xf32, #tpu.memory_space<any>> -> memref<1x128xf32, #tpu.memory_space<any>>
    %c7_i32_62 = arith.constant 7 : i32
    %c0_i32_63 = arith.constant 0 : i32
    %77 = tpu.memref_slice %arg13[%c7_i32_62, %c0_i32_63] : memref<8x128xf32, #tpu.memory_space<vmem>> -> memref<1x128xf32, #tpu.memory_space<vmem>>
    %78 = tpu.memref_slice %arg14[%c7_i32_60] : memref<8x!tpu.dma_semaphore, #tpu.memory_space<semaphore_mem>> -> memref<1x!tpu.dma_semaphore, #tpu.memory_space<semaphore_mem>>
    %79 = tpu.memref_squeeze %78 : memref<1x!tpu.dma_semaphore, #tpu.memory_space<semaphore_mem>> -> memref<!tpu.dma_semaphore, #tpu.memory_space<semaphore_mem>>
    tpu.wait_dma2 semaphore(%79 : memref<!tpu.dma_semaphore, #tpu.memory_space<semaphore_mem>>) src(%76 : memref<1x128xf32, #tpu.memory_space<any>>) dst(%77 : memref<1x128xf32, #tpu.memory_space<vmem>>)
    %c0_64 = arith.constant 0 : index
    %c0_65 = arith.constant 0 : index
    %80 = vector.load %arg13[%c0_64, %c0_65] : memref<8x128xf32, #tpu.memory_space<vmem>>, vector<8x128xf32>
    %c0_66 = arith.constant 0 : index
    %c0_67 = arith.constant 0 : index
    %c0_68 = arith.constant 0 : index
    %81 = vector.load %arg1[%c0_66, %c0_67, %c0_68] : memref<2x8x128xf32, #tpu.memory_space<vmem>>, vector<1x8x128xf32>
    %82 = vector.shape_cast %81 : vector<1x8x128xf32> to vector<8x128xf32>
    %c0_69 = arith.constant 0 : index
    %c0_70 = arith.constant 0 : index
    %c0_71 = arith.constant 0 : index
    %83 = vector.load %arg2[%c0_69, %c0_70, %c0_71] : memref<2x8x128xf32, #tpu.memory_space<vmem>>, vector<1x8x128xf32>
    %84 = vector.shape_cast %83 : vector<1x8x128xf32> to vector<8x128xf32>
    %85 = tpu.concatenate %80, %82 in 1 : vector<8x128xf32>, vector<8x128xf32> -> vector<8x256xf32>
    %86 = arith.truncf %85 : vector<8x256xf32> to vector<8x256xbf16>
    %c0_72 = arith.constant 0 : index
    %c0_73 = arith.constant 0 : index
    %87 = vector.load %arg3[%c0_72, %c0_73] : memref<256x512xbf16, #tpu.memory_space<vmem>>, vector<256x512xbf16>
    %cst = arith.constant dense<0.000000e+00> : vector<8x512xf32>
    %88 = tpu.matmul %86, %87, %cst {dimension_numbers = #tpu.dot_dimension_numbers<[1], [0], [0], [1], [0, 0, 1, 1], [], []>} : vector<8x256xbf16>, vector<256x512xbf16>, vector<8x512xf32> -> vector<8x512xf32>
    %c0_74 = arith.constant 0 : index
    %c0_75 = arith.constant 0 : index
    %89 = vector.load %arg4[%c0_74, %c0_75] : memref<8x512xf32, #tpu.memory_space<vmem>>, vector<8x512xf32>
    %90 = arith.addf %88, %89 : vector<8x512xf32>
    %91 = vector.extract_strided_slice %90 {offsets = [0, 0], sizes = [8, 128], strides = [1, 1]} : vector<8x512xf32> to vector<8x128xf32>
    %92 = arith.negf %91 : vector<8x128xf32>
    %93 = math.exp %92 : vector<8x128xf32>
    %cst_76 = arith.constant 1.000000e+00 : f32
    %94 = vector.broadcast %cst_76 : f32 to vector<8x128xf32>
    %95 = arith.addf %94, %93 : vector<8x128xf32>
    %96 = arith.divf %94, %95 : vector<8x128xf32>
    %97 = vector.extract_strided_slice %90 {offsets = [0, 128], sizes = [8, 128], strides = [1, 1]} : vector<8x512xf32> to vector<8x128xf32>
    %98 = arith.negf %97 : vector<8x128xf32>
    %99 = math.exp %98 : vector<8x128xf32>
    %cst_77 = arith.constant 1.000000e+00 : f32
    %100 = vector.broadcast %cst_77 : f32 to vector<8x128xf32>
    %101 = arith.addf %100, %99 : vector<8x128xf32>
    %102 = arith.divf %100, %101 : vector<8x128xf32>
    %103 = vector.extract_strided_slice %90 {offsets = [0, 256], sizes = [8, 128], strides = [1, 1]} : vector<8x512xf32> to vector<8x128xf32>
    %104 = math.tanh %103 : vector<8x128xf32>
    %105 = vector.extract_strided_slice %90 {offsets = [0, 384], sizes = [8, 128], strides = [1, 1]} : vector<8x512xf32> to vector<8x128xf32>
    %106 = arith.negf %105 : vector<8x128xf32>
    %107 = math.exp %106 : vector<8x128xf32>
    %cst_78 = arith.constant 1.000000e+00 : f32
    %108 = vector.broadcast %cst_78 : f32 to vector<8x128xf32>
    %109 = arith.addf %108, %107 : vector<8x128xf32>
    %110 = arith.divf %108, %109 : vector<8x128xf32>
    %111 = arith.mulf %102, %84 : vector<8x128xf32>
    %112 = arith.mulf %96, %104 : vector<8x128xf32>
    %113 = arith.addf %111, %112 : vector<8x128xf32>
    %114 = math.tanh %113 : vector<8x128xf32>
    %115 = arith.mulf %110, %114 : vector<8x128xf32>
    %c1_79 = arith.constant 1 : index
    %c0_80 = arith.constant 0 : index
    %c0_81 = arith.constant 0 : index
    %116 = vector.load %arg1[%c1_79, %c0_80, %c0_81] : memref<2x8x128xf32, #tpu.memory_space<vmem>>, vector<1x8x128xf32>
    %117 = vector.shape_cast %116 : vector<1x8x128xf32> to vector<8x128xf32>
    %c1_82 = arith.constant 1 : index
    %c0_83 = arith.constant 0 : index
    %c0_84 = arith.constant 0 : index
    %118 = vector.load %arg2[%c1_82, %c0_83, %c0_84] : memref<2x8x128xf32, #tpu.memory_space<vmem>>, vector<1x8x128xf32>
    %119 = vector.shape_cast %118 : vector<1x8x128xf32> to vector<8x128xf32>
    %120 = tpu.concatenate %115, %117 in 1 : vector<8x128xf32>, vector<8x128xf32> -> vector<8x256xf32>
    %121 = arith.truncf %120 : vector<8x256xf32> to vector<8x256xbf16>
    %c0_85 = arith.constant 0 : index
    %c0_86 = arith.constant 0 : index
    %122 = vector.load %arg5[%c0_85, %c0_86] : memref<256x512xbf16, #tpu.memory_space<vmem>>, vector<256x512xbf16>
    %cst_87 = arith.constant dense<0.000000e+00> : vector<8x512xf32>
    %123 = tpu.matmul %121, %122, %cst_87 {dimension_numbers = #tpu.dot_dimension_numbers<[1], [0], [0], [1], [0, 0, 1, 1], [], []>} : vector<8x256xbf16>, vector<256x512xbf16>, vector<8x512xf32> -> vector<8x512xf32>
    %c0_88 = arith.constant 0 : index
    %c0_89 = arith.constant 0 : index
    %124 = vector.load %arg6[%c0_88, %c0_89] : memref<8x512xf32, #tpu.memory_space<vmem>>, vector<8x512xf32>
    %125 = arith.addf %123, %124 : vector<8x512xf32>
    %126 = vector.extract_strided_slice %125 {offsets = [0, 0], sizes = [8, 128], strides = [1, 1]} : vector<8x512xf32> to vector<8x128xf32>
    %127 = arith.negf %126 : vector<8x128xf32>
    %128 = math.exp %127 : vector<8x128xf32>
    %cst_90 = arith.constant 1.000000e+00 : f32
    %129 = vector.broadcast %cst_90 : f32 to vector<8x128xf32>
    %130 = arith.addf %129, %128 : vector<8x128xf32>
    %131 = arith.divf %129, %130 : vector<8x128xf32>
    %132 = vector.extract_strided_slice %125 {offsets = [0, 128], sizes = [8, 128], strides = [1, 1]} : vector<8x512xf32> to vector<8x128xf32>
    %133 = arith.negf %132 : vector<8x128xf32>
    %134 = math.exp %133 : vector<8x128xf32>
    %cst_91 = arith.constant 1.000000e+00 : f32
    %135 = vector.broadcast %cst_91 : f32 to vector<8x128xf32>
    %136 = arith.addf %135, %134 : vector<8x128xf32>
    %137 = arith.divf %135, %136 : vector<8x128xf32>
    %138 = vector.extract_strided_slice %125 {offsets = [0, 256], sizes = [8, 128], strides = [1, 1]} : vector<8x512xf32> to vector<8x128xf32>
    %139 = math.tanh %138 : vector<8x128xf32>
    %140 = vector.extract_strided_slice %125 {offsets = [0, 384], sizes = [8, 128], strides = [1, 1]} : vector<8x512xf32> to vector<8x128xf32>
    %141 = arith.negf %140 : vector<8x128xf32>
    %142 = math.exp %141 : vector<8x128xf32>
    %cst_92 = arith.constant 1.000000e+00 : f32
    %143 = vector.broadcast %cst_92 : f32 to vector<8x128xf32>
    %144 = arith.addf %143, %142 : vector<8x128xf32>
    %145 = arith.divf %143, %144 : vector<8x128xf32>
    %146 = arith.mulf %137, %119 : vector<8x128xf32>
    %147 = arith.mulf %131, %139 : vector<8x128xf32>
    %148 = arith.addf %146, %147 : vector<8x128xf32>
    %149 = math.tanh %148 : vector<8x128xf32>
    %150 = arith.mulf %145, %149 : vector<8x128xf32>
    %151 = arith.truncf %150 : vector<8x128xf32> to vector<8x128xbf16>
    %c0_93 = arith.constant 0 : index
    %c0_94 = arith.constant 0 : index
    %152 = vector.load %arg7[%c0_93, %c0_94] : memref<128x256xbf16, #tpu.memory_space<vmem>>, vector<128x256xbf16>
    %cst_95 = arith.constant dense<0.000000e+00> : vector<8x256xf32>
    %153 = tpu.matmul %151, %152, %cst_95 {dimension_numbers = #tpu.dot_dimension_numbers<[1], [0], [0], [1], [0, 0, 1, 1], [], []>} : vector<8x128xbf16>, vector<128x256xbf16>, vector<8x256xf32> -> vector<8x256xf32>
    %c0_96 = arith.constant 0 : index
    %c0_97 = arith.constant 0 : index
    %154 = vector.load %arg8[%c0_96, %c0_97] : memref<8x256xf32, #tpu.memory_space<vmem>>, vector<8x256xf32>
    %155 = arith.addf %153, %154 : vector<8x256xf32>
    %c0_98 = arith.constant 0 : index
    %c0_99 = arith.constant 0 : index
    %156 = vector.load %arg10[%c0_98, %c0_99] : memref<8x256xf32, #tpu.memory_space<vmem>>, vector<8x256xf32>
    tpu.vector_store %arg10[%c0_98, %c0_99], %155 {strides = array<i32>} : memref<8x256xf32, #tpu.memory_space<vmem>>, vector<8x256xf32>,
    %c0_100 = arith.constant 0 : index
    %c0_101 = arith.constant 0 : index
    %c0_102 = arith.constant 0 : index
    %157 = vector.load %arg11[%c0_100, %c0_101, %c0_102] : memref<2x8x128xf32, #tpu.memory_space<vmem>>, vector<1x8x128xf32>
    %158 = vector.shape_cast %157 : vector<1x8x128xf32> to vector<8x128xf32>
    %159 = vector.shape_cast %115 : vector<8x128xf32> to vector<1x8x128xf32>
    tpu.vector_store %arg11[%c0_100, %c0_101, %c0_102], %159 {strides = array<i32>} : memref<2x8x128xf32, #tpu.memory_space<vmem>>, vector<1x8x128xf32>,
    %c1_103 = arith.constant 1 : index
    %c0_104 = arith.constant 0 : index
    %c0_105 = arith.constant 0 : index
    %160 = vector.load %arg11[%c1_103, %c0_104, %c0_105] : memref<2x8x128xf32, #tpu.memory_space<vmem>>, vector<1x8x128xf32>
    %161 = vector.shape_cast %160 : vector<1x8x128xf32> to vector<8x128xf32>
    %162 = vector.shape_cast %150 : vector<8x128xf32> to vector<1x8x128xf32>
    tpu.vector_store %arg11[%c1_103, %c0_104, %c0_105], %162 {strides = array<i32>} : memref<2x8x128xf32, #tpu.memory_space<vmem>>, vector<1x8x128xf32>,
    %c0_106 = arith.constant 0 : index
    %c0_107 = arith.constant 0 : index
    %c0_108 = arith.constant 0 : index
    %163 = vector.load %arg12[%c0_106, %c0_107, %c0_108] : memref<2x8x128xf32, #tpu.memory_space<vmem>>, vector<1x8x128xf32>
    %164 = vector.shape_cast %163 : vector<1x8x128xf32> to vector<8x128xf32>
    %165 = vector.shape_cast %113 : vector<8x128xf32> to vector<1x8x128xf32>
    tpu.vector_store %arg12[%c0_106, %c0_107, %c0_108], %165 {strides = array<i32>} : memref<2x8x128xf32, #tpu.memory_space<vmem>>, vector<1x8x128xf32>,
    %c1_109 = arith.constant 1 : index
    %c0_110 = arith.constant 0 : index
    %c0_111 = arith.constant 0 : index
    %166 = vector.load %arg12[%c1_109, %c0_110, %c0_111] : memref<2x8x128xf32, #tpu.memory_space<vmem>>, vector<1x8x128xf32>
    %167 = vector.shape_cast %166 : vector<1x8x128xf32> to vector<8x128xf32>
    %168 = vector.shape_cast %148 : vector<8x128xf32> to vector<1x8x128xf32>
    tpu.vector_store %arg12[%c1_109, %c0_110, %c0_111], %168 {strides = array<i32>} : memref<2x8x128xf32, #tpu.memory_space<vmem>>, vector<1x8x128xf32>,
    return
  }
}

</mosaic_0001>

<llo_original>
// kernel: tpu_custom_call.1
$region0: #{tpu_custom_call.1}
  #allocation0 [shape = 'u32[]', space=smem, size = 0x4, offset = 0x4, fixed_abs, tag = 'smem constant byte address 0x4 - core index']
  #allocation1 [shape = 'u32[72,128]{1,0:T(1,128)}', space=vmem, size = 0x9000, scoped, tag = 'internal scratch']
  #allocation2 [shape = 'f32[8,128]{1,0:T(8,128)}', space=vmem, size = 0x1000, scoped, tag = 'scratch operand']
  #allocation3 [shape = 's32[8]{0}', space=sflag, size = 0x20, scoped, tag = 'scratch operand']
  #allocation21 [shape = 's32[]', space=sflag, size = 0x4, offset = 0, fixed_abs, tag = 'sflag constant byte address 0x0 - dummy sync flag']
  #allocation22 [shape = 's32[]', space=sflag, size = 0x4, offset = 0, fixed_abs, tag = 'sflag constant byte address 0x0 - dummy sync flag']
  #allocation23 [shape = 'u32[]', space=smem, size = 0x4, offset = 0x44, fixed_abs, tag = 'smem constant byte address 0x44 - assertion arg 0']
  #allocation24 [shape = 'u32[]', space=smem, size = 0x4, offset = 0x48, fixed_abs, tag = 'smem constant byte address 0x48 - assertion arg 1']
  #allocation25 [shape = 's32[]', space=sflag, size = 0x4, offset = 0, fixed_abs, tag = 'sflag constant byte address 0x0 - dummy sync flag']
  #allocation26 [shape = 's32[]', space=sflag, size = 0x4, offset = 0, fixed_abs, tag = 'sflag constant byte address 0x0 - dummy sync flag']
  #allocation27 [shape = 's32[]', space=sflag, size = 0x4, offset = 0, fixed_abs, tag = 'sflag constant byte address 0x0 - dummy sync flag']
  #allocation28 [shape = 's32[]', space=sflag, size = 0x4, offset = 0, fixed_abs, tag = 'sflag constant byte address 0x0 - dummy sync flag']
  #allocation29 [shape = 's32[]', space=sflag, size = 0x4, offset = 0, fixed_abs, tag = 'sflag constant byte address 0x0 - dummy sync flag']
  #allocation30 [shape = 's32[]', space=sflag, size = 0x4, offset = 0, fixed_abs, tag = 'sflag constant byte address 0x0 - dummy sync flag']
  #allocation31 [shape = 's32[]', space=sflag, size = 0x4, offset = 0, fixed_abs, tag = 'sflag constant byte address 0x0 - dummy sync flag']
  #allocation32 [shape = 's32[]', space=sflag, size = 0x4, offset = 0, fixed_abs, tag = 'sflag constant byte address 0x0 - dummy sync flag']
  #allocation33 [shape = 's32[]', space=sflag, size = 0x4, offset = 0, fixed_abs, tag = 'sflag constant byte address 0x0 - dummy sync flag']
  #allocation34 [shape = 's32[]', space=sflag, size = 0x4, offset = 0, fixed_abs, tag = 'sflag constant byte address 0x0 - dummy sync flag']
  #allocation35 [shape = 's32[]', space=sflag, size = 0x4, offset = 0, fixed_abs, tag = 'sflag constant byte address 0x0 - dummy sync flag']
  #allocation36 [shape = 's32[]', space=sflag, size = 0x4, offset = 0, fixed_abs, tag = 'sflag constant byte address 0x0 - dummy sync flag']
  #allocation37 [shape = 's32[]', space=sflag, size = 0x4, offset = 0, fixed_abs, tag = 'sflag constant byte address 0x0 - dummy sync flag']
  #allocation38 [shape = 's32[]', space=sflag, size = 0x4, offset = 0, fixed_abs, tag = 'sflag constant byte address 0x0 - dummy sync flag']
  %s0 = inlined_call_operand.vmem [shape: s32[8], index: 0, kind: input, shape index: {}]
  %s1 = inlined_call_operand.hbm [shape: f32[2,8,128], index: 1, kind: input, shape index: {}, may-alias: {1,11}]
  %s2 = inlined_call_operand.hbm [shape: f32[2,8,128], index: 2, kind: input, shape index: {}, may-alias: {2,12}]
  %s3 = inlined_call_operand.hbm [shape: bf16[256,512], index: 3, kind: input, shape index: {}]
  %s4 = inlined_call_operand.vmem [shape: f32[8,512], index: 4, kind: input, shape index: {}]
  %s5 = inlined_call_operand.hbm [shape: bf16[256,512], index: 5, kind: input, shape index: {}]
  %s6 = inlined_call_operand.hbm [shape: f32[8,512], index: 6, kind: input, shape index: {}]
  %s7 = inlined_call_operand.hbm [shape: bf16[128,256], index: 7, kind: input, shape index: {}]
  %s8 = inlined_call_operand.vmem [shape: f32[8,256], index: 8, kind: input, shape index: {}]
  %s9 = inlined_call_operand.hbm [shape: f32[256,128], index: 9, kind: input, shape index: {}]
  %s10 = inlined_call_operand.hbm [shape: f32[8,256], index: 10, kind: output, shape index: {0}]
  %s11 = inlined_call_operand.hbm [shape: f32[2,8,128], index: 11, kind: output, shape index: {1}, may-alias: {1,11}]
  %s12 = inlined_call_operand.hbm [shape: f32[2,8,128], index: 12, kind: output, shape index: {2}, may-alias: {2,12}]
  %13 = xla_tuple %s10, %s11, %s12
  %s14 = sld [smem:[#allocation0]]
  $region122: #{tpu_custom_call.1} parent=0
    _
  %s16 = ssub.s32 1, %s14
  %s17 = scalar_select 0, %s16, %s14
  $region1: #{tpu_custom_call.1} parent=0
    #allocation4 [shape = 'u8[512]{0}', space=smem, size = 0x200, scoped, tag = 'input window, operand 0, single buffered']
    #allocation5 [shape = 's32[1]{0}', space=sflag, size = 0x4, scoped, tag = 'scoped memory for tpu_custom_call.1']
    #allocation6 [shape = 's32[1]{0}', space=sflag, size = 0x4, scoped, tag = 'scoped memory for tpu_custom_call.1']
    #allocation7 [shape = 's32[1]{0}', space=sflag, size = 0x4, scoped, tag = 'scoped memory for tpu_custom_call.1']
    #allocation8 [shape = 'u8[8192]{0}', space=vmem, size = 0x2000, scoped, tag = 'input window, operand 1, single buffered']
    #allocation9 [shape = 'u8[8192]{0}', space=vmem, size = 0x2000, scoped, tag = 'input window, operand 2, single buffered']
    #allocation10 [shape = 's32[1]{0}', space=sflag, size = 0x4, scoped, tag = 'scoped memory for tpu_custom_call.1']
    #allocation11 [shape = 'u8[262144]{0}', space=vmem, size = 0x40000, scoped, tag = 'input window, operand 3, single buffered']
    #allocation12 [shape = 'u8[262144]{0}', space=vmem, size = 0x40000, scoped, tag = 'input window, operand 5, single buffered']
    #allocation13 [shape = 's32[1]{0}', space=sflag, size = 0x4, scoped, tag = 'scoped memory for tpu_custom_call.1']
    #allocation14 [shape = 'u8[16384]{0}', space=vmem, size = 0x4000, scoped, tag = 'input window, operand 6, single buffered']
    #allocation15 [shape = 'u8[65536]{0}', space=vmem, size = 0x10000, scoped, tag = 'input window, operand 7, single buffered']
    #allocation16 [shape = 's32[1]{0}', space=sflag, size = 0x4, scoped, tag = 'scoped memory for tpu_custom_call.1']
    #allocation17 [shape = 'u8[8192]{0}', space=vmem, size = 0x2000, scoped, tag = 'output window, operand 0, single buffered']
    #allocation18 [shape = 'u8[8192]{0}', space=vmem, size = 0x2000, scoped, tag = 'output window, operand 1, single buffered']
    #allocation19 [shape = 's32[1]{0}', space=sflag, size = 0x4, scoped, tag = 'scoped memory for tpu_custom_call.1']
    #allocation20 [shape = 'u8[8192]{0}', space=vmem, size = 0x2000, scoped, tag = 'output window, operand 2, single buffered']
    %18 = vsyncpa [#allocation7], 0
    %19 = vsyncpa [#allocation5], 0
    %20 = vsyncpa [#allocation10], 0
    %21 = vsyncpa [#allocation13], 0
    %22 = vsyncpa [#allocation16], 0
    %23 = vsyncpa [#allocation6], 0
    %24 = vsyncpa [#allocation19], 0
    // Predicated region
    $region2: #{tpu_custom_call.1} parent=1 // pred_check
      _
    $region3: #{tpu_custom_call.1} parent=1 // pred_check_branch
      %26 = sbr.rel (0) target = $region5
    $region4: #{tpu_custom_call.1} parent=1 // pred_region
      %28 = vsyncadd [#allocation7], 0
      %s30 = sshll.u32 %s0, 4
      %s31 = int_to_ptr.vmem [resolvable:$true] %s30
      %33 = dma.vmem_to_smem %s31, 16, [#allocation4], [#allocation7]
    $region5: #{tpu_custom_call.1} parent=1 // pred_fallthru
      _
    // Predicated region
    $region6: #{tpu_custom_call.1} parent=1 // pred_check
      _
    $region7: #{tpu_custom_call.1} parent=1 // pred_check_branch
      %35 = sbr.rel (0) target = $region9
    $region8: #{tpu_custom_call.1} parent=1 // pred_region
      %37 = vsyncadd [#allocation5], 0
      %s38 = sshll.u32 %s1, 4
      %s39 = int_to_ptr.hbm [resolvable:$true] %s38
      %s40 = sshll.u32 [#allocation8], 4
      %s41 = int_to_ptr.vmem [resolvable:$true] %s40
      %46 = dma.hbm_to_vmem [thread:$0]  %s39, 256, %s41, [#allocation5], 128, 128, 8
    $region9: #{tpu_custom_call.1} parent=1 // pred_fallthru
      _
    // Predicated region
    $region10: #{tpu_custom_call.1} parent=1 // pred_check
      _
    $region11: #{tpu_custom_call.1} parent=1 // pred_check_branch
      %48 = sbr.rel (0) target = $region13
    $region12: #{tpu_custom_call.1} parent=1 // pred_region
      %50 = vsyncadd [#allocation10], 0
      %s51 = sshll.u32 %s2, 4
      %s52 = int_to_ptr.hbm [resolvable:$true] %s51
      %s53 = sshll.u32 [#allocation9], 4
      %s54 = int_to_ptr.vmem [resolvable:$true] %s53
      %59 = dma.hbm_to_vmem [thread:$0]  %s52, 256, %s54, [#allocation10], 128, 128, 8
    $region13: #{tpu_custom_call.1} parent=1 // pred_fallthru
      _
    // Predicated region
    $region14: #{tpu_custom_call.1} parent=1 // pred_check
      _
    $region15: #{tpu_custom_call.1} parent=1 // pred_check_branch
      %61 = sbr.rel (0) target = $region17
    $region16: #{tpu_custom_call.1} parent=1 // pred_region
      %63 = vsyncadd [#allocation10], 0
      %s64 = sshll.u32 %s3, 4
      %s65 = int_to_ptr.hbm [resolvable:$true] %s64
      %s66 = sshll.u32 [#allocation11], 4
      %s67 = int_to_ptr.vmem [resolvable:$true] %s66
      %72 = dma.hbm_to_vmem [thread:$0]  %s65, 8192, %s67, [#allocation10], 256, 256, 16
    $region17: #{tpu_custom_call.1} parent=1 // pred_fallthru
      _
    // Predicated region
    $region18: #{tpu_custom_call.1} parent=1 // pred_check
      _
    $region19: #{tpu_custom_call.1} parent=1 // pred_check_branch
      %74 = sbr.rel (0) target = $region21
    $region20: #{tpu_custom_call.1} parent=1 // pred_region
      _
    $region21: #{tpu_custom_call.1} parent=1 // pred_fallthru
      _
    // Predicated region
    $region22: #{tpu_custom_call.1} parent=1 // pred_check
      _
    $region23: #{tpu_custom_call.1} parent=1 // pred_check_branch
      %76 = sbr.rel (0) target = $region25
    $region24: #{tpu_custom_call.1} parent=1 // pred_region
      %78 = vsyncadd [#allocation13], 0
      %s79 = sshll.u32 %s5, 4
      %s80 = int_to_ptr.hbm [resolvable:$true] %s79
      %s81 = sshll.u32 [#allocation12], 4
      %s82 = int_to_ptr.vmem [resolvable:$true] %s81
      %87 = dma.hbm_to_vmem [thread:$0]  %s80, 8192, %s82, [#allocation13], 256, 256, 16
    $region25: #{tpu_custom_call.1} parent=1 // pred_fallthru
      _
    // Predicated region
    $region26: #{tpu_custom_call.1} parent=1 // pred_check
      _
    $region27: #{tpu_custom_call.1} parent=1 // pred_check_branch
      %89 = sbr.rel (0) target = $region29
    $region28: #{tpu_custom_call.1} parent=1 // pred_region
      %91 = vsyncadd [#allocation13], 0
      %s93 = sshll.u32 %s6, 4
      %s94 = int_to_ptr.hbm [resolvable:$true] %s93
      %s95 = sshll.u32 [#allocation14], 4
      %s96 = int_to_ptr.vmem [resolvable:$true] %s95
      %98 = dma.hbm_to_vmem [thread:$0]  %s94, 512, %s96, [#allocation13]
    $region29: #{tpu_custom_call.1} parent=1 // pred_fallthru
      _
    // Predicated region
    $region30: #{tpu_custom_call.1} parent=1 // pred_check
      _
    $region31: #{tpu_custom_call.1} parent=1 // pred_check_branch
      %100 = sbr.rel (0) target = $region33
    $region32: #{tpu_custom_call.1} parent=1 // pred_region
      %102 = vsyncadd [#allocation16], 0
      %s103 = sshll.u32 %s7, 4
      %s104 = int_to_ptr.hbm [resolvable:$true] %s103
      %s105 = sshll.u32 [#allocation15], 4
      %s106 = int_to_ptr.vmem [resolvable:$true] %s105
      %111 = dma.hbm_to_vmem [thread:$0]  %s104, 2048, %s106, [#allocation16], 128, 128, 8
    $region33: #{tpu_custom_call.1} parent=1 // pred_fallthru
      _
    // Predicated region
    $region34: #{tpu_custom_call.1} parent=1 // pred_check
      _
    $region35: #{tpu_custom_call.1} parent=1 // pred_check_branch
      %113 = sbr.rel (0) target = $region37
    $region36: #{tpu_custom_call.1} parent=1 // pred_region
      _
    $region37: #{tpu_custom_call.1} parent=1 // pred_fallthru
      _
    // Predicated region
    $region38: #{tpu_custom_call.1} parent=1 // pred_check
      _
    $region39: #{tpu_custom_call.1} parent=1 // pred_check_branch
      %115 = sbr.rel (0) target = $region41
    $region40: #{tpu_custom_call.1} parent=1 // pred_region
      %117 = dma.done [#allocation7], 16
    $region41: #{tpu_custom_call.1} parent=1 // pred_fallthru
      _
    // Predicated region
    $region42: #{tpu_custom_call.1} parent=1 // pred_check
      _
    $region43: #{tpu_custom_call.1} parent=1 // pred_check_branch
      %119 = sbr.rel (0) target = $region45
    $region44: #{tpu_custom_call.1} parent=1 // pred_region
      %121 = dma.done [#allocation5], 256
    $region45: #{tpu_custom_call.1} parent=1 // pred_fallthru
      _
    // Predicated region
    $region46: #{tpu_custom_call.1} parent=1 // pred_check
      _
    $region47: #{tpu_custom_call.1} parent=1 // pred_check_branch
      %123 = sbr.rel (0) target = $region49
    $region48: #{tpu_custom_call.1} parent=1 // pred_region
      %125 = dma.done [#allocation10], 256
    $region49: #{tpu_custom_call.1} parent=1 // pred_fallthru
      _
    // Predicated region
    $region50: #{tpu_custom_call.1} parent=1 // pred_check
      _
    $region51: #{tpu_custom_call.1} parent=1 // pred_check_branch
      %127 = sbr.rel (0) target = $region53
    $region52: #{tpu_custom_call.1} parent=1 // pred_region
      %129 = dma.done [#allocation10], 8192
    $region53: #{tpu_custom_call.1} parent=1 // pred_fallthru
      _
    // Predicated region
    $region54: #{tpu_custom_call.1} parent=1 // pred_check
      _
    $region55: #{tpu_custom_call.1} parent=1 // pred_check_branch
      %131 = sbr.rel (0) target = $region57
    $region56: #{tpu_custom_call.1} parent=1 // pred_region
      %133 = dma.done [#allocation13], 8192
    $region57: #{tpu_custom_call.1} parent=1 // pred_fallthru
      _
    // Predicated region
    $region58: #{tpu_custom_call.1} parent=1 // pred_check
      _
    $region59: #{tpu_custom_call.1} parent=1 // pred_check_branch
      %135 = sbr.rel (0) target = $region61
    $region60: #{tpu_custom_call.1} parent=1 // pred_region
      %137 = dma.done [#allocation13], 512
    $region61: #{tpu_custom_call.1} parent=1 // pred_fallthru
      _
    // Predicated region
    $region62: #{tpu_custom_call.1} parent=1 // pred_check
      _
    $region63: #{tpu_custom_call.1} parent=1 // pred_check_branch
      %139 = sbr.rel (0) target = $region65
    $region64: #{tpu_custom_call.1} parent=1 // pred_region
      %141 = dma.done [#allocation16], 2048
    $region65: #{tpu_custom_call.1} parent=1 // pred_fallthru
      _
    %142 = sfence
    %s143 = sld [smem:[#allocation4]]
    %s144 = scalar_lea.hbm %s9, %s143
    // Predicated region
    $region66: #{tpu_custom_call.1} parent=1 // pred_check
      _
    $region67: #{tpu_custom_call.1} parent=1 // pred_check_branch
      %146 = sbr.rel target = $region69
    $region68: #{tpu_custom_call.1} parent=1 // pred_region
      %147 = sst [smem:[#allocation23]] [#allocation22]
      %148 = sst [smem:[#allocation24]] [#allocation21]
    $region69: #{tpu_custom_call.1} parent=1 // pred_fallthru
      _
    %150 = shalt.err (0)
    %s152 = sshll.u32 %s144, 4
    %s153 = int_to_ptr.hbm [resolvable:$true] %s152
    %s154 = sshll.u32 [#allocation2], 4
    %s155 = int_to_ptr.vmem [resolvable:$true] %s154
    %157 = dma.hbm_to_vmem [thread:$0]  %s153, 16, %s155, [#allocation3]
    %s158 = sld [smem:[#allocation4 + $0x1]]
    %s159 = scalar_lea.hbm %s9, %s158
    %s160 = scalar_lea.vmem [#allocation2], 1
    %s161 = scalar_lea.sflag [#allocation3], 1
    // Predicated region
    $region70: #{tpu_custom_call.1} parent=1 // pred_check
      _
    $region71: #{tpu_custom_call.1} parent=1 // pred_check_branch
      %163 = sbr.rel target = $region73
    $region72: #{tpu_custom_call.1} parent=1 // pred_region
      %164 = sst [smem:[#allocation23]] [#allocation26]
      %165 = sst [smem:[#allocation24]] [#allocation25]
    $region73: #{tpu_custom_call.1} parent=1 // pred_fallthru
      _
    %167 = shalt.err (0)
    %s169 = sshll.u32 %s159, 4
    %s170 = int_to_ptr.hbm [resolvable:$true] %s169
    %s171 = sshll.u32 %s160, 4
    %s172 = int_to_ptr.vmem [resolvable:$true] %s171
    %174 = dma.hbm_to_vmem [thread:$0]  %s170, 16, %s172, %s161
    %s175 = sld [smem:[#allocation4 + $0x2]]
    %s176 = scalar_lea.hbm %s9, %s175
    %s177 = scalar_lea.vmem [#allocation2], 2
    %s178 = scalar_lea.sflag [#allocation3], 2
    // Predicated region
    $region74: #{tpu_custom_call.1} parent=1 // pred_check
      _
    $region75: #{tpu_custom_call.1} parent=1 // pred_check_branch
      %180 = sbr.rel target = $region77
    $region76: #{tpu_custom_call.1} parent=1 // pred_region
      %181 = sst [smem:[#allocation23]] [#allocation28]
      %182 = sst [smem:[#allocation24]] [#allocation27]
    $region77: #{tpu_custom_call.1} parent=1 // pred_fallthru
      _
    %184 = shalt.err (0)
    %s186 = sshll.u32 %s176, 4
    %s187 = int_to_ptr.hbm [resolvable:$true] %s186
    %s188 = sshll.u32 %s177, 4
    %s189 = int_to_ptr.vmem [resolvable:$true] %s188
    %191 = dma.hbm_to_vmem [thread:$0]  %s187, 16, %s189, %s178
    %s192 = sld [smem:[#allocation4 + $0x3]]
    %s193 = scalar_lea.hbm %s9, %s192
    %s194 = scalar_lea.vmem [#allocation2], 3
    %s195 = scalar_lea.sflag [#allocation3], 3
    // Predicated region
    $region78: #{tpu_custom_call.1} parent=1 // pred_check
      _
    $region79: #{tpu_custom_call.1} parent=1 // pred_check_branch
      %197 = sbr.rel target = $region81
    $region80: #{tpu_custom_call.1} parent=1 // pred_region
      %198 = sst [smem:[#allocation23]] [#allocation30]
      %199 = sst [smem:[#allocation24]] [#allocation29]
    $region81: #{tpu_custom_call.1} parent=1 // pred_fallthru
      _
    %201 = shalt.err (0)
    %s203 = sshll.u32 %s193, 4
    %s204 = int_to_ptr.hbm [resolvable:$true] %s203
    %s205 = sshll.u32 %s194, 4
    %s206 = int_to_ptr.vmem [resolvable:$true] %s205
    %208 = dma.hbm_to_vmem [thread:$0]  %s204, 16, %s206, %s195
    %s209 = sld [smem:[#allocation4 + $0x4]]
    %s210 = scalar_lea.hbm %s9, %s209
    %s211 = scalar_lea.vmem [#allocation2], 4
    %s212 = scalar_lea.sflag [#allocation3], 4
    // Predicated region
    $region82: #{tpu_custom_call.1} parent=1 // pred_check
      _
    $region83: #{tpu_custom_call.1} parent=1 // pred_check_branch
      %214 = sbr.rel target = $region85
    $region84: #{tpu_custom_call.1} parent=1 // pred_region
      %215 = sst [smem:[#allocation23]] [#allocation32]
      %216 = sst [smem:[#allocation24]] [#allocation31]
    $region85: #{tpu_custom_call.1} parent=1 // pred_fallthru
      _
    %218 = shalt.err (0)
    %s220 = sshll.u32 %s210, 4
    %s221 = int_to_ptr.hbm [resolvable:$true] %s220
    %s222 = sshll.u32 %s211, 4
    %s223 = int_to_ptr.vmem [resolvable:$true] %s222
    %225 = dma.hbm_to_vmem [thread:$0]  %s221, 16, %s223, %s212
    %s226 = sld [smem:[#allocation4 + $0x5]]
    %s227 = scalar_lea.hbm %s9, %s226
    %s228 = scalar_lea.vmem [#allocation2], 5
    %s229 = scalar_lea.sflag [#allocation3], 5
    // Predicated region
    $region86: #{tpu_custom_call.1} parent=1 // pred_check
      _
    $region87: #{tpu_custom_call.1} parent=1 // pred_check_branch
      %231 = sbr.rel target = $region89
    $region88: #{tpu_custom_call.1} parent=1 // pred_region
      %232 = sst [smem:[#allocation23]] [#allocation34]
      %233 = sst [smem:[#allocation24]] [#allocation33]
    $region89: #{tpu_custom_call.1} parent=1 // pred_fallthru
      _
    %235 = shalt.err (0)
    %s237 = sshll.u32 %s227, 4
    %s238 = int_to_ptr.hbm [resolvable:$true] %s237
    %s239 = sshll.u32 %s228, 4
    %s240 = int_to_ptr.vmem [resolvable:$true] %s239
    %242 = dma.hbm_to_vmem [thread:$0]  %s238, 16, %s240, %s229
    %s243 = sld [smem:[#allocation4 + $0x6]]
    %s244 = scalar_lea.hbm %s9, %s243
    %s245 = scalar_lea.vmem [#allocation2], 6
    %s246 = scalar_lea.sflag [#allocation3], 6
    // Predicated region
    $region90: #{tpu_custom_call.1} parent=1 // pred_check
      _
    $region91: #{tpu_custom_call.1} parent=1 // pred_check_branch
      %248 = sbr.rel target = $region93
    $region92: #{tpu_custom_call.1} parent=1 // pred_region
      %249 = sst [smem:[#allocation23]] [#allocation36]
      %250 = sst [smem:[#allocation24]] [#allocation35]
    $region93: #{tpu_custom_call.1} parent=1 // pred_fallthru
      _
    %252 = shalt.err (0)
    %s254 = sshll.u32 %s244, 4
    %s255 = int_to_ptr.hbm [resolvable:$true] %s254
    %s256 = sshll.u32 %s245, 4
    %s257 = int_to_ptr.vmem [resolvable:$true] %s256
    %259 = dma.hbm_to_vmem [thread:$0]  %s255, 16, %s257, %s246
    %s260 = sld [smem:[#allocation4 + $0x7]]
    %s261 = scalar_lea.hbm %s9, %s260
    %s262 = scalar_lea.vmem [#allocation2], 7
    %s263 = scalar_lea.sflag [#allocation3], 7
    // Predicated region
    $region94: #{tpu_custom_call.1} parent=1 // pred_check
      _
    $region95: #{tpu_custom_call.1} parent=1 // pred_check_branch
      %265 = sbr.rel target = $region97
    $region96: #{tpu_custom_call.1} parent=1 // pred_region
      %266 = sst [smem:[#allocation23]] [#allocation38]
      %267 = sst [smem:[#allocation24]] [#allocation37]
    $region97: #{tpu_custom_call.1} parent=1 // pred_fallthru
      _
    %269 = shalt.err (0)
    %s271 = sshll.u32 %s261, 4
    %s272 = int_to_ptr.hbm [resolvable:$true] %s271
    %s273 = sshll.u32 %s262, 4
    %s274 = int_to_ptr.vmem [resolvable:$true] %s273
    %276 = dma.hbm_to_vmem [thread:$0]  %s272, 16, %s274, %s263
    %s277 = sld [smem:[#allocation4]]
    %s278 = smul.u32 1, 1
    %s279 = sshll.u32 %s278, 4
    %280 = dma.done [#allocation3], %s279
    %s281 = sld [smem:[#allocation4 + $0x1]]
    %s282 = sshll.u32 %s278, 4
    %283 = dma.done %s161, %s282
    %s284 = sld [smem:[#allocation4 + $0x2]]
    %s285 = sshll.u32 %s278, 4
    %286 = dma.done %s178, %s285
    %s287 = sld [smem:[#allocation4 + $0x3]]
    %s288 = sshll.u32 %s278, 4
    %289 = dma.done %s195, %s288
    %s290 = sld [smem:[#allocation4 + $0x4]]
    %s291 = sshll.u32 %s278, 4
    %292 = dma.done %s212, %s291
    %s293 = sld [smem:[#allocation4 + $0x5]]
    %s294 = sshll.u32 %s278, 4
    %295 = dma.done %s229, %s294
    %s296 = sld [smem:[#allocation4 + $0x6]]
    %s297 = sshll.u32 %s278, 4
    %298 = dma.done %s246, %s297
    %s299 = sld [smem:[#allocation4 + $0x7]]
    %s300 = sshll.u32 %s278, 4
    %301 = dma.done %s263, %s300
    %v302 = vld [vmem:[#allocation2] sm:$0xff]
    %v303 = vld [vmem:[#allocation8] sm:$0xff]
    %v304 = vld [vmem:[#allocation9] sm:$0xff]
    %v305 = vpack.c.bf16 %v302, %v302
    %v306 = vpack.c.bf16 %v303, %v303
    %v307 = vld [vmem:[#allocation11] sm:$0xff]
    %v308 = vld [vmem:[#allocation11 + $0x8] sm:$0xff]
    %v309 = vld [vmem:[#allocation11 + $0x10] sm:$0xff]
    %v310 = vld [vmem:[#allocation11 + $0x18] sm:$0xff]
    %v311 = vld [vmem:[#allocation11 + $0x20] sm:$0xff]
    %v312 = vld [vmem:[#allocation11 + $0x28] sm:$0xff]
    %v313 = vld [vmem:[#allocation11 + $0x30] sm:$0xff]
    %v314 = vld [vmem:[#allocation11 + $0x38] sm:$0xff]
    %v315 = vld [vmem:[#allocation11 + $0x40] sm:$0xff]
    %v316 = vld [vmem:[#allocation11 + $0x48] sm:$0xff]
    %v317 = vld [vmem:[#allocation11 + $0x50] sm:$0xff]
    %v318 = vld [vmem:[#allocation11 + $0x58] sm:$0xff]
    %v319 = vld [vmem:[#allocation11 + $0x60] sm:$0xff]
    %v320 = vld [vmem:[#allocation11 + $0x68] sm:$0xff]
    %v321 = vld [vmem:[#allocation11 + $0x70] sm:$0xff]
    %v322 = vld [vmem:[#allocation11 + $0x78] sm:$0xff]
    %v323 = vld [vmem:[#allocation11 + $0x80] sm:$0xff]
    %v324 = vld [vmem:[#allocation11 + $0x88] sm:$0xff]
    %v325 = vld [vmem:[#allocation11 + $0x90] sm:$0xff]
    %v326 = vld [vmem:[#allocation11 + $0x98] sm:$0xff]
    %v327 = vld [vmem:[#allocation11 + $0xa0] sm:$0xff]
    %v328 = vld [vmem:[#allocation11 + $0xa8] sm:$0xff]
    %v329 = vld [vmem:[#allocation11 + $0xb0] sm:$0xff]
    %v330 = vld [vmem:[#allocation11 + $0xb8] sm:$0xff]
    %v331 = vld [vmem:[#allocation11 + $0xc0] sm:$0xff]
    %v332 = vld [vmem:[#allocation11 + $0xc8] sm:$0xff]
    %v333 = vld [vmem:[#allocation11 + $0xd0] sm:$0xff]
    %v334 = vld [vmem:[#allocation11 + $0xd8] sm:$0xff]
    %v335 = vld [vmem:[#allocation11 + $0xe0] sm:$0xff]
    %v336 = vld [vmem:[#allocation11 + $0xe8] sm:$0xff]
    %v337 = vld [vmem:[#allocation11 + $0xf0] sm:$0xff]
    %v338 = vld [vmem:[#allocation11 + $0xf8] sm:$0xff]
    %v339 = vld [vmem:[#allocation11 + $0x100] sm:$0xff]
    %v340 = vld [vmem:[#allocation11 + $0x108] sm:$0xff]
    %v341 = vld [vmem:[#allocation11 + $0x110] sm:$0xff]
    %v342 = vld [vmem:[#allocation11 + $0x118] sm:$0xff]
    %v343 = vld [vmem:[#allocation11 + $0x120] sm:$0xff]
    %v344 = vld [vmem:[#allocation11 + $0x128] sm:$0xff]
    %v345 = vld [vmem:[#allocation11 + $0x130] sm:$0xff]
    %v346 = vld [vmem:[#allocation11 + $0x138] sm:$0xff]
    %v347 = vld [vmem:[#allocation11 + $0x140] sm:$0xff]
    %v348 = vld [vmem:[#allocation11 + $0x148] sm:$0xff]
    %v349 = vld [vmem:[#allocation11 + $0x150] sm:$0xff]
    %v350 = vld [vmem:[#allocation11 + $0x158] sm:$0xff]
    %v351 = vld [vmem:[#allocation11 + $0x160] sm:$0xff]
    %v352 = vld [vmem:[#allocation11 + $0x168] sm:$0xff]
    %v353 = vld [vmem:[#allocation11 + $0x170] sm:$0xff]
    %v354 = vld [vmem:[#allocation11 + $0x178] sm:$0xff]
    %v355 = vld [vmem:[#allocation11 + $0x180] sm:$0xff]
    %v356 = vld [vmem:[#allocation11 + $0x188] sm:$0xff]
    %v357 = vld [vmem:[#allocation11 + $0x190] sm:$0xff]
    %v358 = vld [vmem:[#allocation11 + $0x198] sm:$0xff]
    %v359 = vld [vmem:[#allocation11 + $0x1a0] sm:$0xff]
    %v360 = vld [vmem:[#allocation11 + $0x1a8] sm:$0xff]
    %v361 = vld [vmem:[#allocation11 + $0x1b0] sm:$0xff]
    %v362 = vld [vmem:[#allocation11 + $0x1b8] sm:$0xff]
    %v363 = vld [vmem:[#allocation11 + $0x1c0] sm:$0xff]
    %v364 = vld [vmem:[#allocation11 + $0x1c8] sm:$0xff]
    %v365 = vld [vmem:[#allocation11 + $0x1d0] sm:$0xff]
    %v366 = vld [vmem:[#allocation11 + $0x1d8] sm:$0xff]
    %v367 = vld [vmem:[#allocation11 + $0x1e0] sm:$0xff]
    %v368 = vld [vmem:[#allocation11 + $0x1e8] sm:$0xff]
    %v369 = vld [vmem:[#allocation11 + $0x1f0] sm:$0xff]
    %v370 = vld [vmem:[#allocation11 + $0x1f8] sm:$0xff]
    %v371 = vld [vmem:[%s4] sm:$0xff]
    %v372 = vld [vmem:[%s4 + $0x8] sm:$0xff]
    %v373 = vld [vmem:[%s4 + $0x10] sm:$0xff]
    %v374 = vld [vmem:[%s4 + $0x18] sm:$0xff]
    %v439 = vunpack.c.l.b16 %v307
    %v440 = vunpack.c.h.b16 %v307
    %v441 = vunpack.c.l.b16 %v308
    %v442 = vunpack.c.h.b16 %v308
    %v443 = vunpack.c.l.b16 %v309
    %v444 = vunpack.c.h.b16 %v309
    %v445 = vunpack.c.l.b16 %v310
    %v446 = vunpack.c.h.b16 %v310
    %v447 = vunpack.c.l.b16 %v311
    %v448 = vunpack.c.h.b16 %v311
    %v449 = vunpack.c.l.b16 %v312
    %v450 = vunpack.c.h.b16 %v312
    %v451 = vunpack.c.l.b16 %v313
    %v452 = vunpack.c.h.b16 %v313
    %v453 = vunpack.c.l.b16 %v314
    %v454 = vunpack.c.h.b16 %v314
    %v455 = vunpack.c.l.b16 %v315
    %v456 = vunpack.c.h.b16 %v315
    %v457 = vunpack.c.l.b16 %v316
    %v458 = vunpack.c.h.b16 %v316
    %v459 = vunpack.c.l.b16 %v317
    %v460 = vunpack.c.h.b16 %v317
    %v461 = vunpack.c.l.b16 %v318
    %v462 = vunpack.c.h.b16 %v318
    %v463 = vunpack.c.l.b16 %v319
    %v464 = vunpack.c.h.b16 %v319
    %v465 = vunpack.c.l.b16 %v320
    %v466 = vunpack.c.h.b16 %v320
    %v467 = vunpack.c.l.b16 %v321
    %v468 = vunpack.c.h.b16 %v321
    %v469 = vunpack.c.l.b16 %v322
    %v470 = vunpack.c.h.b16 %v322
    %v471 = vunpack.c.l.b16 %v323
    %v472 = vunpack.c.h.b16 %v323
    %v473 = vunpack.c.l.b16 %v324
    %v474 = vunpack.c.h.b16 %v324
    %v475 = vunpack.c.l.b16 %v325
    %v476 = vunpack.c.h.b16 %v325
    %v477 = vunpack.c.l.b16 %v326
    %v478 = vunpack.c.h.b16 %v326
    %v479 = vunpack.c.l.b16 %v327
    %v480 = vunpack.c.h.b16 %v327
    %v481 = vunpack.c.l.b16 %v328
    %v482 = vunpack.c.h.b16 %v328
    %v483 = vunpack.c.l.b16 %v329
    %v484 = vunpack.c.h.b16 %v329
    %v485 = vunpack.c.l.b16 %v330
    %v486 = vunpack.c.h.b16 %v330
    %v487 = vunpack.c.l.b16 %v331
    %v488 = vunpack.c.h.b16 %v331
    %v489 = vunpack.c.l.b16 %v332
    %v490 = vunpack.c.h.b16 %v332
    %v491 = vunpack.c.l.b16 %v333
    %v492 = vunpack.c.h.b16 %v333
    %v493 = vunpack.c.l.b16 %v334
    %v494 = vunpack.c.h.b16 %v334
    %v495 = vunpack.c.l.b16 %v335
    %v496 = vunpack.c.h.b16 %v335
    %v497 = vunpack.c.l.b16 %v336
    %v498 = vunpack.c.h.b16 %v336
    %v499 = vunpack.c.l.b16 %v337
    %v500 = vunpack.c.h.b16 %v337
    %v501 = vunpack.c.l.b16 %v338
    %v502 = vunpack.c.h.b16 %v338
    %v503 = vunpack.c.l.b16 %v339
    %v504 = vunpack.c.h.b16 %v339
    %v505 = vunpack.c.l.b16 %v340
    %v506 = vunpack.c.h.b16 %v340
    %v507 = vunpack.c.l.b16 %v341
    %v508 = vunpack.c.h.b16 %v341
    %v509 = vunpack.c.l.b16 %v342
    %v510 = vunpack.c.h.b16 %v342
    %v511 = vunpack.c.l.b16 %v343
    %v512 = vunpack.c.h.b16 %v343
    %v513 = vunpack.c.l.b16 %v344
    %v514 = vunpack.c.h.b16 %v344
    %v515 = vunpack.c.l.b16 %v345
    %v516 = vunpack.c.h.b16 %v345
    %v517 = vunpack.c.l.b16 %v346
    %v518 = vunpack.c.h.b16 %v346
    %v519 = vunpack.c.l.b16 %v347
    %v520 = vunpack.c.h.b16 %v347
    %v521 = vunpack.c.l.b16 %v348
    %v522 = vunpack.c.h.b16 %v348
    %v523 = vunpack.c.l.b16 %v349
    %v524 = vunpack.c.h.b16 %v349
    %v525 = vunpack.c.l.b16 %v350
    %v526 = vunpack.c.h.b16 %v350
    %v527 = vunpack.c.l.b16 %v351
    %v528 = vunpack.c.h.b16 %v351
    %v529 = vunpack.c.l.b16 %v352
    %v530 = vunpack.c.h.b16 %v352
    %v531 = vunpack.c.l.b16 %v353
    %v532 = vunpack.c.h.b16 %v353
    %v533 = vunpack.c.l.b16 %v354
    %v534 = vunpack.c.h.b16 %v354
    %v535 = vunpack.c.l.b16 %v355
    %v536 = vunpack.c.h.b16 %v355
    %v537 = vunpack.c.l.b16 %v356
    %v538 = vunpack.c.h.b16 %v356
    %v539 = vunpack.c.l.b16 %v357
    %v540 = vunpack.c.h.b16 %v357
    %v541 = vunpack.c.l.b16 %v358
    %v542 = vunpack.c.h.b16 %v358
    %v543 = vunpack.c.l.b16 %v359
    %v544 = vunpack.c.h.b16 %v359
    %v545 = vunpack.c.l.b16 %v360
    %v546 = vunpack.c.h.b16 %v360
    %v547 = vunpack.c.l.b16 %v361
    %v548 = vunpack.c.h.b16 %v361
    %v549 = vunpack.c.l.b16 %v362
    %v550 = vunpack.c.h.b16 %v362
    %v551 = vunpack.c.l.b16 %v363
    %v552 = vunpack.c.h.b16 %v363
    %v553 = vunpack.c.l.b16 %v364
    %v554 = vunpack.c.h.b16 %v364
    %v555 = vunpack.c.l.b16 %v365
    %v556 = vunpack.c.h.b16 %v365
    %v557 = vunpack.c.l.b16 %v366
    %v558 = vunpack.c.h.b16 %v366
    %v559 = vunpack.c.l.b16 %v367
    %v560 = vunpack.c.h.b16 %v367
    %v561 = vunpack.c.l.b16 %v368
    %v562 = vunpack.c.h.b16 %v368
    %v563 = vunpack.c.l.b16 %v369
    %v564 = vunpack.c.h.b16 %v369
    %v565 = vunpack.c.l.b16 %v370
    %v566 = vunpack.c.h.b16 %v370
    %v567 = vpack.c.b16 %v443, %v439
    %v568 = vpack.c.b16 %v444, %v440
    %v569 = vpack.c.b16 %v445, %v441
    %v570 = vpack.c.b16 %v446, %v442
    %v571 = vpack.c.b16 %v451, %v447
    %v572 = vpack.c.b16 %v452, %v448
    %v573 = vpack.c.b16 %v453, %v449
    %v574 = vpack.c.b16 %v454, %v450
    %v575 = vpack.c.b16 %v459, %v455
    %v576 = vpack.c.b16 %v460, %v456
    %v577 = vpack.c.b16 %v461, %v457
    %v578 = vpack.c.b16 %v462, %v458
    %v579 = vpack.c.b16 %v467, %v463
    %v580 = vpack.c.b16 %v468, %v464
    %v581 = vpack.c.b16 %v469, %v465
    %v582 = vpack.c.b16 %v470, %v466
    %v583 = vpack.c.b16 %v475, %v471
    %v584 = vpack.c.b16 %v476, %v472
    %v585 = vpack.c.b16 %v477, %v473
    %v586 = vpack.c.b16 %v478, %v474
    %v587 = vpack.c.b16 %v483, %v479
    %v588 = vpack.c.b16 %v484, %v480
    %v589 = vpack.c.b16 %v485, %v481
    %v590 = vpack.c.b16 %v486, %v482
    %v591 = vpack.c.b16 %v491, %v487
    %v592 = vpack.c.b16 %v492, %v488
    %v593 = vpack.c.b16 %v493, %v489
    %v594 = vpack.c.b16 %v494, %v490
    %v595 = vpack.c.b16 %v499, %v495
    %v596 = vpack.c.b16 %v500, %v496
    %v597 = vpack.c.b16 %v501, %v497
    %v598 = vpack.c.b16 %v502, %v498
    %v599 = vpack.c.b16 %v507, %v503
    %v600 = vpack.c.b16 %v508, %v504
    %v601 = vpack.c.b16 %v509, %v505
    %v602 = vpack.c.b16 %v510, %v506
    %v603 = vpack.c.b16 %v515, %v511
    %v604 = vpack.c.b16 %v516, %v512
    %v605 = vpack.c.b16 %v517, %v513
    %v606 = vpack.c.b16 %v518, %v514
    %v607 = vpack.c.b16 %v523, %v519
    %v608 = vpack.c.b16 %v524, %v520
    %v609 = vpack.c.b16 %v525, %v521
    %v610 = vpack.c.b16 %v526, %v522
    %v611 = vpack.c.b16 %v531, %v527
    %v612 = vpack.c.b16 %v532, %v528
    %v613 = vpack.c.b16 %v533, %v529
    %v614 = vpack.c.b16 %v534, %v530
    %v615 = vpack.c.b16 %v539, %v535
    %v616 = vpack.c.b16 %v540, %v536
    %v617 = vpack.c.b16 %v541, %v537
    %v618 = vpack.c.b16 %v542, %v538
    %v619 = vpack.c.b16 %v547, %v543
    %v620 = vpack.c.b16 %v548, %v544
    %v621 = vpack.c.b16 %v549, %v545
    %v622 = vpack.c.b16 %v550, %v546
    %v623 = vpack.c.b16 %v555, %v551
    %v624 = vpack.c.b16 %v556, %v552
    %v625 = vpack.c.b16 %v557, %v553
    %v626 = vpack.c.b16 %v558, %v554
    %v627 = vpack.c.b16 %v563, %v559
    %v628 = vpack.c.b16 %v564, %v560
    %v629 = vpack.c.b16 %v565, %v561
    %v630 = vpack.c.b16 %v566, %v562
    %695 = vmatpush.bf16.msra.mxu0 %v595
    %696 = vmatpush.bf16.msra.mxu0 %v591
    %697 = vmatpush.bf16.msra.mxu0 %v587
    %698 = vmatpush.bf16.msra.mxu0 %v583
    %699 = vmatpush.bf16.msra.mxu0 %v579
    %700 = vmatpush.bf16.msra.mxu0 %v575
    %701 = vmatpush.bf16.msra.mxu0 %v571
    %702 = vmatpush.bf16.msra.mxu0 %v567
    %703 = vmatmul.bf16.gmra.mxu0 %v305
    %v704 = vpop.f32.mrf.mxu0
    %v705 = vadd.f32 %v371, %v704
    %v706 = vpop.f32.mrf.mxu0
    %707 = vdwg.mxu0
    %708 = vmatpush.bf16.msra.mxu0 %v627
    %709 = vmatpush.bf16.msra.mxu0 %v623
    %710 = vmatpush.bf16.msra.mxu0 %v619
    %711 = vmatpush.bf16.msra.mxu0 %v615
    %712 = vmatpush.bf16.msra.mxu0 %v611
    %713 = vmatpush.bf16.msra.mxu0 %v607
    %714 = vmatpush.bf16.msra.mxu0 %v603
    %715 = vmatpush.bf16.msra.mxu0 %v599
    %716 = vmatmul.bf16.gmra.mxu0 %v306
    %v717 = vpop.f32.mrf.mxu0
    %v718 = vadd.f32 %v705, %v717
    %v719 = vpop.f32.mrf.mxu0
    %720 = vdwg.mxu0
    %721 = vmatpush.bf16.msra.mxu0 %v596
    %722 = vmatpush.bf16.msra.mxu0 %v592
    %723 = vmatpush.bf16.msra.mxu0 %v588
    %724 = vmatpush.bf16.msra.mxu0 %v584
    %725 = vmatpush.bf16.msra.mxu0 %v580
    %726 = vmatpush.bf16.msra.mxu0 %v576
    %727 = vmatpush.bf16.msra.mxu0 %v572
    %728 = vmatpush.bf16.msra.mxu0 %v568
    %729 = vmatmul.bf16.gmra.mxu0 %v305
    %v730 = vpop.f32.mrf.mxu0
    %v731 = vadd.f32 %v372, %v730
    %v732 = vpop.f32.mrf.mxu0
    %733 = vdwg.mxu0
    %734 = vmatpush.bf16.msra.mxu0 %v628
    %735 = vmatpush.bf16.msra.mxu0 %v624
    %736 = vmatpush.bf16.msra.mxu0 %v620
    %737 = vmatpush.bf16.msra.mxu0 %v616
    %738 = vmatpush.bf16.msra.mxu0 %v612
    %739 = vmatpush.bf16.msra.mxu0 %v608
    %740 = vmatpush.bf16.msra.mxu0 %v604
    %741 = vmatpush.bf16.msra.mxu0 %v600
    %742 = vmatmul.bf16.gmra.mxu0 %v306
    %v743 = vpop.f32.mrf.mxu0
    %v744 = vadd.f32 %v731, %v743
    %v745 = vpop.f32.mrf.mxu0
    %746 = vdwg.mxu0
    %747 = vmatpush.bf16.msra.mxu0 %v597
    %748 = vmatpush.bf16.msra.mxu0 %v593
    %749 = vmatpush.bf16.msra.mxu0 %v589
    %750 = vmatpush.bf16.msra.mxu0 %v585
    %751 = vmatpush.bf16.msra.mxu0 %v581
    %752 = vmatpush.bf16.msra.mxu0 %v577
    %753 = vmatpush.bf16.msra.mxu0 %v573
    %754 = vmatpush.bf16.msra.mxu0 %v569
    %755 = vmatmul.bf16.gmra.mxu0 %v305
    %v756 = vpop.f32.mrf.mxu0
    %v757 = vadd.f32 %v373, %v756
    %v758 = vpop.f32.mrf.mxu0
    %759 = vdwg.mxu0
    %760 = vmatpush.bf16.msra.mxu0 %v629
    %761 = vmatpush.bf16.msra.mxu0 %v625
    %762 = vmatpush.bf16.msra.mxu0 %v621
    %763 = vmatpush.bf16.msra.mxu0 %v617
    %764 = vmatpush.bf16.msra.mxu0 %v613
    %765 = vmatpush.bf16.msra.mxu0 %v609
    %766 = vmatpush.bf16.msra.mxu0 %v605
    %767 = vmatpush.bf16.msra.mxu0 %v601
    %768 = vmatmul.bf16.gmra.mxu0 %v306
    %v769 = vpop.f32.mrf.mxu0
    %v770 = vadd.f32 %v757, %v769
    %v771 = vpop.f32.mrf.mxu0
    %772 = vdwg.mxu0
    %773 = vmatpush.bf16.msra.mxu0 %v598
    %774 = vmatpush.bf16.msra.mxu0 %v594
    %775 = vmatpush.bf16.msra.mxu0 %v590
    %776 = vmatpush.bf16.msra.mxu0 %v586
    %777 = vmatpush.bf16.msra.mxu0 %v582
    %778 = vmatpush.bf16.msra.mxu0 %v578
    %779 = vmatpush.bf16.msra.mxu0 %v574
    %780 = vmatpush.bf16.msra.mxu0 %v570
    %781 = vmatmul.bf16.gmra.mxu0 %v305
    %v782 = vpop.f32.mrf.mxu0
    %v783 = vadd.f32 %v374, %v782
    %v784 = vpop.f32.mrf.mxu0
    %785 = vdwg.mxu0
    %786 = vmatpush.bf16.msra.mxu0 %v630
    %787 = vmatpush.bf16.msra.mxu0 %v626
    %788 = vmatpush.bf16.msra.mxu0 %v622
    %789 = vmatpush.bf16.msra.mxu0 %v618
    %790 = vmatpush.bf16.msra.mxu0 %v614
    %791 = vmatpush.bf16.msra.mxu0 %v610
    %792 = vmatpush.bf16.msra.mxu0 %v606
    %793 = vmatpush.bf16.msra.mxu0 %v602
    %794 = vmatmul.bf16.gmra.mxu0 %v306
    %v795 = vpop.f32.mrf.mxu0
    %v796 = vadd.f32 %v783, %v795
    %v797 = vpop.f32.mrf.mxu0
    %798 = vdwg.mxu0
    %v799 = vxor.u32 %v718, 2147483648
    %v800 = vmul.f32 %v799, 1.442695
    %v801 = vpow.pop %v800
    %v802 = vadd.f32 %v801, 1.0
    %v803 = vrcp.pop %v802
    %v804 = vmul.f32 %v802, %v803
    %v805 = vsub.f32 1.0, %v804
    %v806 = vmul.f32 %v803, %v805
    %v807 = vadd.f32 %v803, %v806
    %vm808 = vweird.f32 %v802
    %vm809 = vweird.f32 %v803
    %vm810 = vmor %vm808, %vm809
    %v811 = vsel %vm810, %v803, %v807
    %v812 = vand.u32 2147483647, %v802
    %vm813 = vcmp.eq.f32.partialorder %v812, 8.507059e+37
    %v814 = vand.u32 %v802, 2147483648
    %v815 = vor.u32 1.1754944e-38, %v814
    %v816 = vsel %vm813, %v815, %v811
    %v817 = vmul.f32 1.0, %v816
    %v818 = vxor.u32 %v744, 2147483648
    %v819 = vmul.f32 %v818, 1.442695
    %v820 = vpow.pop %v819
    %v821 = vadd.f32 %v820, 1.0
    %v822 = vrcp.pop %v821
    %v823 = vmul.f32 %v821, %v822
    %v824 = vsub.f32 1.0, %v823
    %v825 = vmul.f32 %v822, %v824
    %v826 = vadd.f32 %v822, %v825
    %vm827 = vweird.f32 %v821
    %vm828 = vweird.f32 %v822
    %vm829 = vmor %vm827, %vm828
    %v830 = vsel %vm829, %v822, %v826
    %v831 = vand.u32 2147483647, %v821
    %vm832 = vcmp.eq.f32.partialorder %v831, 8.507059e+37
    %v833 = vand.u32 %v821, 2147483648
    %v834 = vor.u32 1.1754944e-38, %v833
    %v835 = vsel %vm832, %v834, %v830
    %v836 = vmul.f32 1.0, %v835
    %v837 = vtanh.pop %v770
    %v838 = vxor.u32 %v796, 2147483648
    %v839 = vmul.f32 %v838, 1.442695
    %v840 = vpow.pop %v839
    %v841 = vadd.f32 %v840, 1.0
    %v842 = vrcp.pop %v841
    %v843 = vmul.f32 %v841, %v842
    %v844 = vsub.f32 1.0, %v843
    %v845 = vmul.f32 %v842, %v844
    %v846 = vadd.f32 %v842, %v845
    %vm847 = vweird.f32 %v841
    %vm848 = vweird.f32 %v842
    %vm849 = vmor %vm847, %vm848
    %v850 = vsel %vm849, %v842, %v846
    %v851 = vand.u32 2147483647, %v841
    %vm852 = vcmp.eq.f32.partialorder %v851, 8.507059e+37
    %v853 = vand.u32 %v841, 2147483648
    %v854 = vor.u32 1.1754944e-38, %v853
    %v855 = vsel %vm852, %v854, %v850
    %v856 = vmul.f32 1.0, %v855
    %v857 = vmul.f32 %v836, %v304
    %v858 = vmul.f32 %v817, %v837
    %v859 = vadd.f32 %v857, %v858
    %v860 = vtanh.pop %v859
    %v861 = vmul.f32 %v856, %v860
    %s862 = scalar_lea.vmem [#allocation8], 8
    %v863 = vld [vmem:[%s862] sm:$0xff]
    %s864 = scalar_lea.vmem [#allocation9], 8
    %v865 = vld [vmem:[%s864] sm:$0xff]
    %v866 = vpack.c.bf16 %v861, %v861
    %v867 = vpack.c.bf16 %v863, %v863
    %v868 = vld [vmem:[#allocation12] sm:$0xff]
    %v869 = vld [vmem:[#allocation12 + $0x8] sm:$0xff]
    %v870 = vld [vmem:[#allocation12 + $0x10] sm:$0xff]
    %v871 = vld [vmem:[#allocation12 + $0x18] sm:$0xff]
    %v872 = vld [vmem:[#allocation12 + $0x20] sm:$0xff]
    %v873 = vld [vmem:[#allocation12 + $0x28] sm:$0xff]
    %v874 = vld [vmem:[#allocation12 + $0x30] sm:$0xff]
    %v875 = vld [vmem:[#allocation12 + $0x38] sm:$0xff]
    %v876 = vld [vmem:[#allocation12 + $0x40] sm:$0xff]
    %v877 = vld [vmem:[#allocation12 + $0x48] sm:$0xff]
    %v878 = vld [vmem:[#allocation12 + $0x50] sm:$0xff]
    %v879 = vld [vmem:[#allocation12 + $0x58] sm:$0xff]
    %v880 = vld [vmem:[#allocation12 + $0x60] sm:$0xff]
    %v881 = vld [vmem:[#allocation12 + $0x68] sm:$0xff]
    %v882 = vld [vmem:[#allocation12 + $0x70] sm:$0xff]
    %v883 = vld [vmem:[#allocation12 + $0x78] sm:$0xff]
    %v884 = vld [vmem:[#allocation12 + $0x80] sm:$0xff]
    %v885 = vld [vmem:[#allocation12 + $0x88] sm:$0xff]
    %v886 = vld [vmem:[#allocation12 + $0x90] sm:$0xff]
    %v887 = vld [vmem:[#allocation12 + $0x98] sm:$0xff]
    %v888 = vld [vmem:[#allocation12 + $0xa0] sm:$0xff]
    %v889 = vld [vmem:[#allocation12 + $0xa8] sm:$0xff]
    %v890 = vld [vmem:[#allocation12 + $0xb0] sm:$0xff]
    %v891 = vld [vmem:[#allocation12 + $0xb8] sm:$0xff]
    %v892 = vld [vmem:[#allocation12 + $0xc0] sm:$0xff]
    %v893 = vld [vmem:[#allocation12 + $0xc8] sm:$0xff]
    %v894 = vld [vmem:[#allocation12 + $0xd0] sm:$0xff]
    %v895 = vld [vmem:[#allocation12 + $0xd8] sm:$0xff]
    %v896 = vld [vmem:[#allocation12 + $0xe0] sm:$0xff]
    %v897 = vld [vmem:[#allocation12 + $0xe8] sm:$0xff]
    %v898 = vld [vmem:[#allocation12 + $0xf0] sm:$0xff]
    %v899 = vld [vmem:[#allocation12 + $0xf8] sm:$0xff]
    %v900 = vld [vmem:[#allocation12 + $0x100] sm:$0xff]
    %v901 = vld [vmem:[#allocation12 + $0x108] sm:$0xff]
    %v902 = vld [vmem:[#allocation12 + $0x110] sm:$0xff]
    %v903 = vld [vmem:[#allocation12 + $0x118] sm:$0xff]
    %v904 = vld [vmem:[#allocation12 + $0x120] sm:$0xff]
    %v905 = vld [vmem:[#allocation12 + $0x128] sm:$0xff]
    %v906 = vld [vmem:[#allocation12 + $0x130] sm:$0xff]
    %v907 = vld [vmem:[#allocation12 + $0x138] sm:$0xff]
    %v908 = vld [vmem:[#allocation12 + $0x140] sm:$0xff]
    %v909 = vld [vmem:[#allocation12 + $0x148] sm:$0xff]
    %v910 = vld [vmem:[#allocation12 + $0x150] sm:$0xff]
    %v911 = vld [vmem:[#allocation12 + $0x158] sm:$0xff]
    %v912 = vld [vmem:[#allocation12 + $0x160] sm:$0xff]
    %v913 = vld [vmem:[#allocation12 + $0x168] sm:$0xff]
    %v914 = vld [vmem:[#allocation12 + $0x170] sm:$0xff]
    %v915 = vld [vmem:[#allocation12 + $0x178] sm:$0xff]
    %v916 = vld [vmem:[#allocation12 + $0x180] sm:$0xff]
    %v917 = vld [vmem:[#allocation12 + $0x188] sm:$0xff]
    %v918 = vld [vmem:[#allocation12 + $0x190] sm:$0xff]
    %v919 = vld [vmem:[#allocation12 + $0x198] sm:$0xff]
    %v920 = vld [vmem:[#allocation12 + $0x1a0] sm:$0xff]
    %v921 = vld [vmem:[#allocation12 + $0x1a8] sm:$0xff]
    %v922 = vld [vmem:[#allocation12 + $0x1b0] sm:$0xff]
    %v923 = vld [vmem:[#allocation12 + $0x1b8] sm:$0xff]
    %v924 = vld [vmem:[#allocation12 + $0x1c0] sm:$0xff]
    %v925 = vld [vmem:[#allocation12 + $0x1c8] sm:$0xff]
    %v926 = vld [vmem:[#allocation12 + $0x1d0] sm:$0xff]
    %v927 = vld [vmem:[#allocation12 + $0x1d8] sm:$0xff]
    %v928 = vld [vmem:[#allocation12 + $0x1e0] sm:$0xff]
    %v929 = vld [vmem:[#allocation12 + $0x1e8] sm:$0xff]
    %v930 = vld [vmem:[#allocation12 + $0x1f0] sm:$0xff]
    %v931 = vld [vmem:[#allocation12 + $0x1f8] sm:$0xff]
    %v932 = vld [vmem:[#allocation14] sm:$0xff]
    %v933 = vld [vmem:[#allocation14 + $0x8] sm:$0xff]
    %v934 = vld [vmem:[#allocation14 + $0x10] sm:$0xff]
    %v935 = vld [vmem:[#allocation14 + $0x18] sm:$0xff]
    %v1000 = vunpack.c.l.b16 %v868
    %v1001 = vunpack.c.h.b16 %v868
    %v1002 = vunpack.c.l.b16 %v869
    %v1003 = vunpack.c.h.b16 %v869
    %v1004 = vunpack.c.l.b16 %v870
    %v1005 = vunpack.c.h.b16 %v870
    %v1006 = vunpack.c.l.b16 %v871
    %v1007 = vunpack.c.h.b16 %v871
    %v1008 = vunpack.c.l.b16 %v872
    %v1009 = vunpack.c.h.b16 %v872
    %v1010 = vunpack.c.l.b16 %v873
    %v1011 = vunpack.c.h.b16 %v873
    %v1012 = vunpack.c.l.b16 %v874
    %v1013 = vunpack.c.h.b16 %v874
    %v1014 = vunpack.c.l.b16 %v875
    %v1015 = vunpack.c.h.b16 %v875
    %v1016 = vunpack.c.l.b16 %v876
    %v1017 = vunpack.c.h.b16 %v876
    %v1018 = vunpack.c.l.b16 %v877
    %v1019 = vunpack.c.h.b16 %v877
    %v1020 = vunpack.c.l.b16 %v878
    %v1021 = vunpack.c.h.b16 %v878
    %v1022 = vunpack.c.l.b16 %v879
    %v1023 = vunpack.c.h.b16 %v879
    %v1024 = vunpack.c.l.b16 %v880
    %v1025 = vunpack.c.h.b16 %v880
    %v1026 = vunpack.c.l.b16 %v881
    %v1027 = vunpack.c.h.b16 %v881
    %v1028 = vunpack.c.l.b16 %v882
    %v1029 = vunpack.c.h.b16 %v882
    %v1030 = vunpack.c.l.b16 %v883
    %v1031 = vunpack.c.h.b16 %v883
    %v1032 = vunpack.c.l.b16 %v884
    %v1033 = vunpack.c.h.b16 %v884
    %v1034 = vunpack.c.l.b16 %v885
    %v1035 = vunpack.c.h.b16 %v885
    %v1036 = vunpack.c.l.b16 %v886
    %v1037 = vunpack.c.h.b16 %v886
    %v1038 = vunpack.c.l.b16 %v887
    %v1039 = vunpack.c.h.b16 %v887
    %v1040 = vunpack.c.l.b16 %v888
    %v1041 = vunpack.c.h.b16 %v888
    %v1042 = vunpack.c.l.b16 %v889
    %v1043 = vunpack.c.h.b16 %v889
    %v1044 = vunpack.c.l.b16 %v890
    %v1045 = vunpack.c.h.b16 %v890
    %v1046 = vunpack.c.l.b16 %v891
    %v1047 = vunpack.c.h.b16 %v891
    %v1048 = vunpack.c.l.b16 %v892
    %v1049 = vunpack.c.h.b16 %v892
    %v1050 = vunpack.c.l.b16 %v893
    %v1051 = vunpack.c.h.b16 %v893
    %v1052 = vunpack.c.l.b16 %v894
    %v1053 = vunpack.c.h.b16 %v894
    %v1054 = vunpack.c.l.b16 %v895
    %v1055 = vunpack.c.h.b16 %v895
    %v1056 = vunpack.c.l.b16 %v896
    %v1057 = vunpack.c.h.b16 %v896
    %v1058 = vunpack.c.l.b16 %v897
    %v1059 = vunpack.c.h.b16 %v897
    %v1060 = vunpack.c.l.b16 %v898
    %v1061 = vunpack.c.h.b16 %v898
    %v1062 = vunpack.c.l.b16 %v899
    %v1063 = vunpack.c.h.b16 %v899
    %v1064 = vunpack.c.l.b16 %v900
    %v1065 = vunpack.c.h.b16 %v900
    %v1066 = vunpack.c.l.b16 %v901
    %v1067 = vunpack.c.h.b16 %v901
    %v1068 = vunpack.c.l.b16 %v902
    %v1069 = vunpack.c.h.b16 %v902
    %v1070 = vunpack.c.l.b16 %v903
    %v1071 = vunpack.c.h.b16 %v903
    %v1072 = vunpack.c.l.b16 %v904
    %v1073 = vunpack.c.h.b16 %v904
    %v1074 = vunpack.c.l.b16 %v905
    %v1075 = vunpack.c.h.b16 %v905
    %v1076 = vunpack.c.l.b16 %v906
    %v1077 = vunpack.c.h.b16 %v906
    %v1078 = vunpack.c.l.b16 %v907
    %v1079 = vunpack.c.h.b16 %v907
    %v1080 = vunpack.c.l.b16 %v908
    %v1081 = vunpack.c.h.b16 %v908
    %v1082 = vunpack.c.l.b16 %v909
    %v1083 = vunpack.c.h.b16 %v909
    %v1084 = vunpack.c.l.b16 %v910
    %v1085 = vunpack.c.h.b16 %v910
    %v1086 = vunpack.c.l.b16 %v911
    %v1087 = vunpack.c.h.b16 %v911
    %v1088 = vunpack.c.l.b16 %v912
    %v1089 = vunpack.c.h.b16 %v912
    %v1090 = vunpack.c.l.b16 %v913
    %v1091 = vunpack.c.h.b16 %v913
    %v1092 = vunpack.c.l.b16 %v914
    %v1093 = vunpack.c.h.b16 %v914
    %v1094 = vunpack.c.l.b16 %v915
    %v1095 = vunpack.c.h.b16 %v915
    %v1096 = vunpack.c.l.b16 %v916
    %v1097 = vunpack.c.h.b16 %v916
    %v1098 = vunpack.c.l.b16 %v917
    %v1099 = vunpack.c.h.b16 %v917
    %v1100 = vunpack.c.l.b16 %v918
    %v1101 = vunpack.c.h.b16 %v918
    %v1102 = vunpack.c.l.b16 %v919
    %v1103 = vunpack.c.h.b16 %v919
    %v1104 = vunpack.c.l.b16 %v920
    %v1105 = vunpack.c.h.b16 %v920
    %v1106 = vunpack.c.l.b16 %v921
    %v1107 = vunpack.c.h.b16 %v921
    %v1108 = vunpack.c.l.b16 %v922
    %v1109 = vunpack.c.h.b16 %v922
    %v1110 = vunpack.c.l.b16 %v923
    %v1111 = vunpack.c.h.b16 %v923
    %v1112 = vunpack.c.l.b16 %v924
    %v1113 = vunpack.c.h.b16 %v924
    %v1114 = vunpack.c.l.b16 %v925
    %v1115 = vunpack.c.h.b16 %v925
    %v1116 = vunpack.c.l.b16 %v926
    %v1117 = vunpack.c.h.b16 %v926
    %v1118 = vunpack.c.l.b16 %v927
    %v1119 = vunpack.c.h.b16 %v927
    %v1120 = vunpack.c.l.b16 %v928
    %v1121 = vunpack.c.h.b16 %v928
    %v1122 = vunpack.c.l.b16 %v929
    %v1123 = vunpack.c.h.b16 %v929
    %v1124 = vunpack.c.l.b16 %v930
    %v1125 = vunpack.c.h.b16 %v930
    %v1126 = vunpack.c.l.b16 %v931
    %v1127 = vunpack.c.h.b16 %v931
    %v1128 = vpack.c.b16 %v1004, %v1000
    %v1129 = vpack.c.b16 %v1005, %v1001
    %v1130 = vpack.c.b16 %v1006, %v1002
    %v1131 = vpack.c.b16 %v1007, %v1003
    %v1132 = vpack.c.b16 %v1012, %v1008
    %v1133 = vpack.c.b16 %v1013, %v1009
    %v1134 = vpack.c.b16 %v1014, %v1010
    %v1135 = vpack.c.b16 %v1015, %v1011
    %v1136 = vpack.c.b16 %v1020, %v1016
    %v1137 = vpack.c.b16 %v1021, %v1017
    %v1138 = vpack.c.b16 %v1022, %v1018
    %v1139 = vpack.c.b16 %v1023, %v1019
    %v1140 = vpack.c.b16 %v1028, %v1024
    %v1141 = vpack.c.b16 %v1029, %v1025
    %v1142 = vpack.c.b16 %v1030, %v1026
    %v1143 = vpack.c.b16 %v1031, %v1027
    %v1144 = vpack.c.b16 %v1036, %v1032
    %v1145 = vpack.c.b16 %v1037, %v1033
    %v1146 = vpack.c.b16 %v1038, %v1034
    %v1147 = vpack.c.b16 %v1039, %v1035
    %v1148 = vpack.c.b16 %v1044, %v1040
    %v1149 = vpack.c.b16 %v1045, %v1041
    %v1150 = vpack.c.b16 %v1046, %v1042
    %v1151 = vpack.c.b16 %v1047, %v1043
    %v1152 = vpack.c.b16 %v1052, %v1048
    %v1153 = vpack.c.b16 %v1053, %v1049
    %v1154 = vpack.c.b16 %v1054, %v1050
    %v1155 = vpack.c.b16 %v1055, %v1051
    %v1156 = vpack.c.b16 %v1060, %v1056
    %v1157 = vpack.c.b16 %v1061, %v1057
    %v1158 = vpack.c.b16 %v1062, %v1058
    %v1159 = vpack.c.b16 %v1063, %v1059
    %v1160 = vpack.c.b16 %v1068, %v1064
    %v1161 = vpack.c.b16 %v1069, %v1065
    %v1162 = vpack.c.b16 %v1070, %v1066
    %v1163 = vpack.c.b16 %v1071, %v1067
    %v1164 = vpack.c.b16 %v1076, %v1072
    %v1165 = vpack.c.b16 %v1077, %v1073
    %v1166 = vpack.c.b16 %v1078, %v1074
    %v1167 = vpack.c.b16 %v1079, %v1075
    %v1168 = vpack.c.b16 %v1084, %v1080
    %v1169 = vpack.c.b16 %v1085, %v1081
    %v1170 = vpack.c.b16 %v1086, %v1082
    %v1171 = vpack.c.b16 %v1087, %v1083
    %v1172 = vpack.c.b16 %v1092, %v1088
    %v1173 = vpack.c.b16 %v1093, %v1089
    %v1174 = vpack.c.b16 %v1094, %v1090
    %v1175 = vpack.c.b16 %v1095, %v1091
    %v1176 = vpack.c.b16 %v1100, %v1096
    %v1177 = vpack.c.b16 %v1101, %v1097
    %v1178 = vpack.c.b16 %v1102, %v1098
    %v1179 = vpack.c.b16 %v1103, %v1099
    %v1180 = vpack.c.b16 %v1108, %v1104
    %v1181 = vpack.c.b16 %v1109, %v1105
    %v1182 = vpack.c.b16 %v1110, %v1106
    %v1183 = vpack.c.b16 %v1111, %v1107
    %v1184 = vpack.c.b16 %v1116, %v1112
    %v1185 = vpack.c.b16 %v1117, %v1113
    %v1186 = vpack.c.b16 %v1118, %v1114
    %v1187 = vpack.c.b16 %v1119, %v1115
    %v1188 = vpack.c.b16 %v1124, %v1120
    %v1189 = vpack.c.b16 %v1125, %v1121
    %v1190 = vpack.c.b16 %v1126, %v1122
    %v1191 = vpack.c.b16 %v1127, %v1123
    %1256 = vmatpush.bf16.msra.mxu0 %v1156
    %1257 = vmatpush.bf16.msra.mxu0 %v1152
    %1258 = vmatpush.bf16.msra.mxu0 %v1148
    %1259 = vmatpush.bf16.msra.mxu0 %v1144
    %1260 = vmatpush.bf16.msra.mxu0 %v1140
    %1261 = vmatpush.bf16.msra.mxu0 %v1136
    %1262 = vmatpush.bf16.msra.mxu0 %v1132
    %1263 = vmatpush.bf16.msra.mxu0 %v1128
    %1264 = vmatmul.bf16.gmra.mxu0 %v866
    %v1265 = vpop.f32.mrf.mxu0
    %v1266 = vadd.f32 %v932, %v1265
    %v1267 = vpop.f32.mrf.mxu0
    %1268 = vdwg.mxu0
    %1269 = vmatpush.bf16.msra.mxu0 %v1188
    %1270 = vmatpush.bf16.msra.mxu0 %v1184
    %1271 = vmatpush.bf16.msra.mxu0 %v1180
    %1272 = vmatpush.bf16.msra.mxu0 %v1176
    %1273 = vmatpush.bf16.msra.mxu0 %v1172
    %1274 = vmatpush.bf16.msra.mxu0 %v1168
    %1275 = vmatpush.bf16.msra.mxu0 %v1164
    %1276 = vmatpush.bf16.msra.mxu0 %v1160
    %1277 = vmatmul.bf16.gmra.mxu0 %v867
    %v1278 = vpop.f32.mrf.mxu0
    %v1279 = vadd.f32 %v1266, %v1278
    %v1280 = vpop.f32.mrf.mxu0
    %1281 = vdwg.mxu0
    %1282 = vmatpush.bf16.msra.mxu0 %v1157
    %1283 = vmatpush.bf16.msra.mxu0 %v1153
    %1284 = vmatpush.bf16.msra.mxu0 %v1149
    %1285 = vmatpush.bf16.msra.mxu0 %v1145
    %1286 = vmatpush.bf16.msra.mxu0 %v1141
    %1287 = vmatpush.bf16.msra.mxu0 %v1137
    %1288 = vmatpush.bf16.msra.mxu0 %v1133
    %1289 = vmatpush.bf16.msra.mxu0 %v1129
    %1290 = vmatmul.bf16.gmra.mxu0 %v866
    %v1291 = vpop.f32.mrf.mxu0
    %v1292 = vadd.f32 %v933, %v1291
    %v1293 = vpop.f32.mrf.mxu0
    %1294 = vdwg.mxu0
    %1295 = vmatpush.bf16.msra.mxu0 %v1189
    %1296 = vmatpush.bf16.msra.mxu0 %v1185
    %1297 = vmatpush.bf16.msra.mxu0 %v1181
    %1298 = vmatpush.bf16.msra.mxu0 %v1177
    %1299 = vmatpush.bf16.msra.mxu0 %v1173
    %1300 = vmatpush.bf16.msra.mxu0 %v1169
    %1301 = vmatpush.bf16.msra.mxu0 %v1165
    %1302 = vmatpush.bf16.msra.mxu0 %v1161
    %1303 = vmatmul.bf16.gmra.mxu0 %v867
    %v1304 = vpop.f32.mrf.mxu0
    %v1305 = vadd.f32 %v1292, %v1304
    %v1306 = vpop.f32.mrf.mxu0
    %1307 = vdwg.mxu0
    %1308 = vmatpush.bf16.msra.mxu0 %v1158
    %1309 = vmatpush.bf16.msra.mxu0 %v1154
    %1310 = vmatpush.bf16.msra.mxu0 %v1150
    %1311 = vmatpush.bf16.msra.mxu0 %v1146
    %1312 = vmatpush.bf16.msra.mxu0 %v1142
    %1313 = vmatpush.bf16.msra.mxu0 %v1138
    %1314 = vmatpush.bf16.msra.mxu0 %v1134
    %1315 = vmatpush.bf16.msra.mxu0 %v1130
    %1316 = vmatmul.bf16.gmra.mxu0 %v866
    %v1317 = vpop.f32.mrf.mxu0
    %v1318 = vadd.f32 %v934, %v1317
    %v1319 = vpop.f32.mrf.mxu0
    %1320 = vdwg.mxu0
    %1321 = vmatpush.bf16.msra.mxu0 %v1190
    %1322 = vmatpush.bf16.msra.mxu0 %v1186
    %1323 = vmatpush.bf16.msra.mxu0 %v1182
    %1324 = vmatpush.bf16.msra.mxu0 %v1178
    %1325 = vmatpush.bf16.msra.mxu0 %v1174
    %1326 = vmatpush.bf16.msra.mxu0 %v1170
    %1327 = vmatpush.bf16.msra.mxu0 %v1166
    %1328 = vmatpush.bf16.msra.mxu0 %v1162
    %1329 = vmatmul.bf16.gmra.mxu0 %v867
    %v1330 = vpop.f32.mrf.mxu0
    %v1331 = vadd.f32 %v1318, %v1330
    %v1332 = vpop.f32.mrf.mxu0
    %1333 = vdwg.mxu0
    %1334 = vmatpush.bf16.msra.mxu0 %v1159
    %1335 = vmatpush.bf16.msra.mxu0 %v1155
    %1336 = vmatpush.bf16.msra.mxu0 %v1151
    %1337 = vmatpush.bf16.msra.mxu0 %v1147
    %1338 = vmatpush.bf16.msra.mxu0 %v1143
    %1339 = vmatpush.bf16.msra.mxu0 %v1139
    %1340 = vmatpush.bf16.msra.mxu0 %v1135
    %1341 = vmatpush.bf16.msra.mxu0 %v1131
    %1342 = vmatmul.bf16.gmra.mxu0 %v866
    %v1343 = vpop.f32.mrf.mxu0
    %v1344 = vadd.f32 %v935, %v1343
    %v1345 = vpop.f32.mrf.mxu0
    %1346 = vdwg.mxu0
    %1347 = vmatpush.bf16.msra.mxu0 %v1191
    %1348 = vmatpush.bf16.msra.mxu0 %v1187
    %1349 = vmatpush.bf16.msra.mxu0 %v1183
    %1350 = vmatpush.bf16.msra.mxu0 %v1179
    %1351 = vmatpush.bf16.msra.mxu0 %v1175
    %1352 = vmatpush.bf16.msra.mxu0 %v1171
    %1353 = vmatpush.bf16.msra.mxu0 %v1167
    %1354 = vmatpush.bf16.msra.mxu0 %v1163
    %1355 = vmatmul.bf16.gmra.mxu0 %v867
    %v1356 = vpop.f32.mrf.mxu0
    %v1357 = vadd.f32 %v1344, %v1356
    %v1358 = vpop.f32.mrf.mxu0
    %1359 = vdwg.mxu0
    %v1360 = vxor.u32 %v1279, 2147483648
    %v1361 = vmul.f32 %v1360, 1.442695
    %v1362 = vpow.pop %v1361
    %v1363 = vadd.f32 %v1362, 1.0
    %v1364 = vrcp.pop %v1363
    %v1365 = vmul.f32 %v1363, %v1364
    %v1366 = vsub.f32 1.0, %v1365
    %v1367 = vmul.f32 %v1364, %v1366
    %v1368 = vadd.f32 %v1364, %v1367
    %vm1369 = vweird.f32 %v1363
    %vm1370 = vweird.f32 %v1364
    %vm1371 = vmor %vm1369, %vm1370
    %v1372 = vsel %vm1371, %v1364, %v1368
    %v1373 = vand.u32 2147483647, %v1363
    %vm1374 = vcmp.eq.f32.partialorder %v1373, 8.507059e+37
    %v1375 = vand.u32 %v1363, 2147483648
    %v1376 = vor.u32 1.1754944e-38, %v1375
    %v1377 = vsel %vm1374, %v1376, %v1372
    %v1378 = vmul.f32 1.0, %v1377
    %v1379 = vxor.u32 %v1305, 2147483648
    %v1380 = vmul.f32 %v1379, 1.442695
    %v1381 = vpow.pop %v1380
    %v1382 = vadd.f32 %v1381, 1.0
    %v1383 = vrcp.pop %v1382
    %v1384 = vmul.f32 %v1382, %v1383
    %v1385 = vsub.f32 1.0, %v1384
    %v1386 = vmul.f32 %v1383, %v1385
    %v1387 = vadd.f32 %v1383, %v1386
    %vm1388 = vweird.f32 %v1382
    %vm1389 = vweird.f32 %v1383
    %vm1390 = vmor %vm1388, %vm1389
    %v1391 = vsel %vm1390, %v1383, %v1387
    %v1392 = vand.u32 2147483647, %v1382
    %vm1393 = vcmp.eq.f32.partialorder %v1392, 8.507059e+37
    %v1394 = vand.u32 %v1382, 2147483648
    %v1395 = vor.u32 1.1754944e-38, %v1394
    %v1396 = vsel %vm1393, %v1395, %v1391
    %v1397 = vmul.f32 1.0, %v1396
    %v1398 = vtanh.pop %v1331
    %v1399 = vxor.u32 %v1357, 2147483648
    %v1400 = vmul.f32 %v1399, 1.442695
    %v1401 = vpow.pop %v1400
    %v1402 = vadd.f32 %v1401, 1.0
    %v1403 = vrcp.pop %v1402
    %v1404 = vmul.f32 %v1402, %v1403
    %v1405 = vsub.f32 1.0, %v1404
    %v1406 = vmul.f32 %v1403, %v1405
    %v1407 = vadd.f32 %v1403, %v1406
    %vm1408 = vweird.f32 %v1402
    %vm1409 = vweird.f32 %v1403
    %vm1410 = vmor %vm1408, %vm1409
    %v1411 = vsel %vm1410, %v1403, %v1407
    %v1412 = vand.u32 2147483647, %v1402
    %vm1413 = vcmp.eq.f32.partialorder %v1412, 8.507059e+37
    %v1414 = vand.u32 %v1402, 2147483648
    %v1415 = vor.u32 1.1754944e-38, %v1414
    %v1416 = vsel %vm1413, %v1415, %v1411
    %v1417 = vmul.f32 1.0, %v1416
    %v1418 = vmul.f32 %v1397, %v865
    %v1419 = vmul.f32 %v1378, %v1398
    %v1420 = vadd.f32 %v1418, %v1419
    %v1421 = vtanh.pop %v1420
    %v1422 = vmul.f32 %v1417, %v1421
    %v1423 = vpack.c.bf16 %v1422, %v1422
    %v1424 = vld [vmem:[#allocation15] sm:$0xff]
    %v1425 = vld [vmem:[#allocation15 + $0x8] sm:$0xff]
    %v1426 = vld [vmem:[#allocation15 + $0x10] sm:$0xff]
    %v1427 = vld [vmem:[#allocation15 + $0x18] sm:$0xff]
    %v1428 = vld [vmem:[#allocation15 + $0x20] sm:$0xff]
    %v1429 = vld [vmem:[#allocation15 + $0x28] sm:$0xff]
    %v1430 = vld [vmem:[#allocation15 + $0x30] sm:$0xff]
    %v1431 = vld [vmem:[#allocation15 + $0x38] sm:$0xff]
    %v1432 = vld [vmem:[#allocation15 + $0x40] sm:$0xff]
    %v1433 = vld [vmem:[#allocation15 + $0x48] sm:$0xff]
    %v1434 = vld [vmem:[#allocation15 + $0x50] sm:$0xff]
    %v1435 = vld [vmem:[#allocation15 + $0x58] sm:$0xff]
    %v1436 = vld [vmem:[#allocation15 + $0x60] sm:$0xff]
    %v1437 = vld [vmem:[#allocation15 + $0x68] sm:$0xff]
    %v1438 = vld [vmem:[#allocation15 + $0x70] sm:$0xff]
    %v1439 = vld [vmem:[#allocation15 + $0x78] sm:$0xff]
    %v1440 = vld [vmem:[%s8] sm:$0xff]
    %v1441 = vld [vmem:[%s8 + $0x8] sm:$0xff]
    %v1458 = vunpack.c.l.b16 %v1424
    %v1459 = vunpack.c.h.b16 %v1424
    %v1460 = vunpack.c.l.b16 %v1425
    %v1461 = vunpack.c.h.b16 %v1425
    %v1462 = vunpack.c.l.b16 %v1426
    %v1463 = vunpack.c.h.b16 %v1426
    %v1464 = vunpack.c.l.b16 %v1427
    %v1465 = vunpack.c.h.b16 %v1427
    %v1466 = vunpack.c.l.b16 %v1428
    %v1467 = vunpack.c.h.b16 %v1428
    %v1468 = vunpack.c.l.b16 %v1429
    %v1469 = vunpack.c.h.b16 %v1429
    %v1470 = vunpack.c.l.b16 %v1430
    %v1471 = vunpack.c.h.b16 %v1430
    %v1472 = vunpack.c.l.b16 %v1431
    %v1473 = vunpack.c.h.b16 %v1431
    %v1474 = vunpack.c.l.b16 %v1432
    %v1475 = vunpack.c.h.b16 %v1432
    %v1476 = vunpack.c.l.b16 %v1433
    %v1477 = vunpack.c.h.b16 %v1433
    %v1478 = vunpack.c.l.b16 %v1434
    %v1479 = vunpack.c.h.b16 %v1434
    %v1480 = vunpack.c.l.b16 %v1435
    %v1481 = vunpack.c.h.b16 %v1435
    %v1482 = vunpack.c.l.b16 %v1436
    %v1483 = vunpack.c.h.b16 %v1436
    %v1484 = vunpack.c.l.b16 %v1437
    %v1485 = vunpack.c.h.b16 %v1437
    %v1486 = vunpack.c.l.b16 %v1438
    %v1487 = vunpack.c.h.b16 %v1438
    %v1488 = vunpack.c.l.b16 %v1439
    %v1489 = vunpack.c.h.b16 %v1439
    %v1490 = vpack.c.b16 %v1460, %v1458
    %v1491 = vpack.c.b16 %v1461, %v1459
    %v1492 = vpack.c.b16 %v1464, %v1462
    %v1493 = vpack.c.b16 %v1465, %v1463
    %v1494 = vpack.c.b16 %v1468, %v1466
    %v1495 = vpack.c.b16 %v1469, %v1467
    %v1496 = vpack.c.b16 %v1472, %v1470
    %v1497 = vpack.c.b16 %v1473, %v1471
    %v1498 = vpack.c.b16 %v1476, %v1474
    %v1499 = vpack.c.b16 %v1477, %v1475
    %v1500 = vpack.c.b16 %v1480, %v1478
    %v1501 = vpack.c.b16 %v1481, %v1479
    %v1502 = vpack.c.b16 %v1484, %v1482
    %v1503 = vpack.c.b16 %v1485, %v1483
    %v1504 = vpack.c.b16 %v1488, %v1486
    %v1505 = vpack.c.b16 %v1489, %v1487
    %1522 = vmatpush.bf16.msra.mxu0 %v1504
    %1523 = vmatpush.bf16.msra.mxu0 %v1502
    %1524 = vmatpush.bf16.msra.mxu0 %v1500
    %1525 = vmatpush.bf16.msra.mxu0 %v1498
    %1526 = vmatpush.bf16.msra.mxu0 %v1496
    %1527 = vmatpush.bf16.msra.mxu0 %v1494
    %1528 = vmatpush.bf16.msra.mxu0 %v1492
    %1529 = vmatpush.bf16.msra.mxu0 %v1490
    %1530 = vmatmul.bf16.gmra.mxu0 %v1423
    %v1531 = vpop.f32.mrf.mxu0
    %v1532 = vadd.f32 %v1440, %v1531
    %v1533 = vpop.f32.mrf.mxu0
    %1534 = vdwg.mxu0
    %1535 = vmatpush.bf16.msra.mxu0 %v1505
    %1536 = vmatpush.bf16.msra.mxu0 %v1503
    %1537 = vmatpush.bf16.msra.mxu0 %v1501
    %1538 = vmatpush.bf16.msra.mxu0 %v1499
    %1539 = vmatpush.bf16.msra.mxu0 %v1497
    %1540 = vmatpush.bf16.msra.mxu0 %v1495
    %1541 = vmatpush.bf16.msra.mxu0 %v1493
    %1542 = vmatpush.bf16.msra.mxu0 %v1491
    %1543 = vmatmul.bf16.gmra.mxu0 %v1423
    %v1544 = vpop.f32.mrf.mxu0
    %v1545 = vadd.f32 %v1441, %v1544
    %v1546 = vpop.f32.mrf.mxu0
    %1547 = vdwg.mxu0
    %1548 = vst [vmem:[#allocation17] sm:$0xff] %v1532
    %1549 = vst [vmem:[#allocation17 + $0x8] sm:$0xff] %v1545
    %1550 = vst [vmem:[#allocation18] sm:$0xff] %v861
    %s1551 = scalar_lea.vmem [#allocation18], 8
    %1552 = vst [vmem:[%s1551] sm:$0xff] %v1422
    %1553 = vst [vmem:[#allocation20] sm:$0xff] %v859
    %s1554 = scalar_lea.vmem [#allocation20], 8
    %1555 = vst [vmem:[%s1554] sm:$0xff] %v1420
    // Predicated region
    $region98: #{tpu_custom_call.1} parent=1 // pred_check
      _
    $region99: #{tpu_custom_call.1} parent=1 // pred_check_branch
      %1557 = sbr.rel (0) target = $region101
    $region100: #{tpu_custom_call.1} parent=1 // pred_region
      %1559 = vsyncadd [#allocation6], 0
      %s1561 = sshll.u32 [#allocation17], 4
      %s1562 = int_to_ptr.vmem [resolvable:$true] %s1561
      %s1563 = sshll.u32 %s10, 4
      %s1564 = int_to_ptr.hbm [resolvable:$true] %s1563
      %1566 = dma.vmem_to_hbm [thread:$0]  %s1562, 256, %s1564, [#allocation6]
    $region101: #{tpu_custom_call.1} parent=1 // pred_fallthru
      _
    // Predicated region
    $region102: #{tpu_custom_call.1} parent=1 // pred_check
      _
    $region103: #{tpu_custom_call.1} parent=1 // pred_check_branch
      %1568 = sbr.rel (0) target = $region105
    $region104: #{tpu_custom_call.1} parent=1 // pred_region
      %1570 = vsyncadd [#allocation19], 0
      %s1571 = sshll.u32 [#allocation18], 4
      %s1572 = int_to_ptr.vmem [resolvable:$true] %s1571
      %s1573 = sshll.u32 %s11, 4
      %s1574 = int_to_ptr.hbm [resolvable:$true] %s1573
      %1579 = dma.vmem_to_hbm [thread:$0]  %s1572, 256, %s1574, [#allocation19], 128, 128, 8
    $region105: #{tpu_custom_call.1} parent=1 // pred_fallthru
      _
    // Predicated region
    $region106: #{tpu_custom_call.1} parent=1 // pred_check
      _
    $region107: #{tpu_custom_call.1} parent=1 // pred_check_branch
      %1581 = sbr.rel (0) target = $region109
    $region108: #{tpu_custom_call.1} parent=1 // pred_region
      %1583 = vsyncadd [#allocation19], 0
      %s1584 = sshll.u32 [#allocation20], 4
      %s1585 = int_to_ptr.vmem [resolvable:$true] %s1584
      %s1586 = sshll.u32 %s12, 4
      %s1587 = int_to_ptr.hbm [resolvable:$true] %s1586
      %1592 = dma.vmem_to_hbm [thread:$0]  %s1585, 256, %s1587, [#allocation19], 128, 128, 8
    $region109: #{tpu_custom_call.1} parent=1 // pred_fallthru
      _
    // Predicated region
    $region110: #{tpu_custom_call.1} parent=1 // pred_check
      _
    $region111: #{tpu_custom_call.1} parent=1 // pred_check_branch
      %1594 = sbr.rel (0) target = $region113
    $region112: #{tpu_custom_call.1} parent=1 // pred_region
      %1596 = dma.done [#allocation6], 256
    $region113: #{tpu_custom_call.1} parent=1 // pred_fallthru
      _
    // Predicated region
    $region114: #{tpu_custom_call.1} parent=1 // pred_check
      _
    $region115: #{tpu_custom_call.1} parent=1 // pred_check_branch
      %1598 = sbr.rel (0) target = $region117
    $region116: #{tpu_custom_call.1} parent=1 // pred_region
      %1600 = dma.done [#allocation19], 256
    $region117: #{tpu_custom_call.1} parent=1 // pred_fallthru
      _
    // Predicated region
    $region118: #{tpu_custom_call.1} parent=1 // pred_check
      _
    $region119: #{tpu_custom_call.1} parent=1 // pred_check_branch
      %1602 = sbr.rel (0) target = $region121
    $region120: #{tpu_custom_call.1} parent=1 // pred_region
      %1604 = dma.done [#allocation19], 256
    $region121: #{tpu_custom_call.1} parent=1 // pred_fallthru
      _
    %1605 = vsyncpa [#allocation5], 1
    %1606 = vsyncpa [#allocation10], 1
    %1607 = vsyncpa [#allocation13], 1
    %1608 = vsyncpa [#allocation16], 1
    %1609 = vsyncpa [#allocation6], 1
    %1610 = vsyncpa [#allocation19], 1
    %1611 = vsyncpa [#allocation7], 1
  %1612 = vsyncmov [#allocation3]
  %s1613 = vpop.sfrf %1612
  %p1614 = scmp.eq.s32.totalorder %s1613, 0
  %p1615 = pneg %p1614
  %1617 = shalt.err (%p1615)
  %s1618 = scalar_lea.sflag [#allocation3], 1
  %1619 = vsyncmov %s1618
  %s1620 = vpop.sfrf %1619
  %p1621 = scmp.eq.s32.totalorder %s1620, 0
  %p1622 = pneg %p1621
  %1624 = shalt.err (%p1622)
  %s1625 = scalar_lea.sflag [#allocation3], 2
  %1626 = vsyncmov %s1625
  %s1627 = vpop.sfrf %1626
  %p1628 = scmp.eq.s32.totalorder %s1627, 0
  %p1629 = pneg %p1628
  %1631 = shalt.err (%p1629)
  %s1632 = scalar_lea.sflag [#allocation3], 3
  %1633 = vsyncmov %s1632
  %s1634 = vpop.sfrf %1633
  %p1635 = scmp.eq.s32.totalorder %s1634, 0
  %p1636 = pneg %p1635
  %1638 = shalt.err (%p1636)
  %s1639 = scalar_lea.sflag [#allocation3], 4
  %1640 = vsyncmov %s1639
  %s1641 = vpop.sfrf %1640
  %p1642 = scmp.eq.s32.totalorder %s1641, 0
  %p1643 = pneg %p1642
  %1645 = shalt.err (%p1643)
  %s1646 = scalar_lea.sflag [#allocation3], 5
  %1647 = vsyncmov %s1646
  %s1648 = vpop.sfrf %1647
  %p1649 = scmp.eq.s32.totalorder %s1648, 0
  %p1650 = pneg %p1649
  %1652 = shalt.err (%p1650)
  %s1653 = scalar_lea.sflag [#allocation3], 6
  %1654 = vsyncmov %s1653
  %s1655 = vpop.sfrf %1654
  %p1656 = scmp.eq.s32.totalorder %s1655, 0
  %p1657 = pneg %p1656
  %1659 = shalt.err (%p1657)
  %s1660 = scalar_lea.sflag [#allocation3], 7
  %1661 = vsyncmov %s1660
  %s1662 = vpop.sfrf %1661
  %p1663 = scmp.eq.s32.totalorder %s1662, 0
  %p1664 = pneg %p1663
  %1666 = shalt.err (%p1664)

</llo_original>
